<compile_context>
chip_gen: v7x
topology: tpu7x:2x2x1
jax: 0.10.0
libtpu: 0.0.40
codegen_flags: <defaults>
</compile_context>

<pallas_src>
import functools

import jax
import jax.numpy as jnp
from jax.experimental import pallas as pl
from jax.experimental.pallas import tpu as pltpu


# ---------------------------------------------------------------------------
# Fused kernel: lane-packed BiLSTM + attention pooling + one-hot row gather
# ---------------------------------------------------------------------------
def _bilstm_attn_gather_kernel(
    idx_ref,      # SMEM [L] int32     label indices to gather
    x_ref,        # VMEM [T*N, 2E] bf16  row t*N+n = [x(t,n) | x(T-1-t,n)]
    w_ih_ref,     # VMEM [2E, 8H] bf16   block-structured packed input projection (both dirs)
    b_ref,        # VMEM [1, 8H]  f32    packed biases
    w_hh_ref,     # VMEM [2H, 8H] bf16   block-diagonal packed recurrent weight
    wa_ref,       # VMEM [2H, A]  bf16   attention projection
    ba_ref,       # VMEM [1, A]   f32
    va_rep_ref,   # VMEM [A, 2H]  f32    attention context vector replicated over 2H lanes
    out_ref,      # VMEM [L, 2H]  f32    gathered rows
    gx_ref,       # scratch VMEM [T*N, 8H] f32 : hoisted, pre-combined input-gate projections
    hpack_ref,    # scratch VMEM [T*N, 2H] f32 : row i*N+n = [h_f(i,n) | h_b(T-1-i,n)]
    *, T, N, H,
):
    H2 = 2 * H
    L = out_ref.shape[0]

    # ---- 1. Hoisted input projection: one MXU matmul, off the recurrent chain.
    #         The fwd(t)/bwd(T-1-t) time combination is already baked into the input layout. ----
    gx_ref[...] = jnp.dot(x_ref[...], w_ih_ref[...],
                          preferred_element_type=jnp.float32) + b_ref[...]

    w_hh = w_hh_ref[...]                                       # [2H, 8H] bf16, resident

    # ---- 2. Lane-packed fwd+bwd recurrence: 1 matmul + 4 full-width activations per step ----
    hc = jnp.zeros((N, H2), jnp.float32)                       # [h_fwd | h_bwd]
    cc = jnp.zeros((N, H2), jnp.float32)                       # [c_fwd | c_bwd]
    for i in range(T):                                         # static unroll, static addresses
        gates = gx_ref[pl.ds(i * N, N), :] + jnp.dot(
            hc.astype(jnp.bfloat16), w_hh, preferred_element_type=jnp.float32)   # [N, 8H]
        # PyTorch gate order i, f, g, o; each slice is a packed [*_fwd | *_bwd] full vreg.
        i_g = jax.nn.sigmoid(gates[:, 0 * H2:1 * H2])
        f_g = jax.nn.sigmoid(gates[:, 1 * H2:2 * H2])
        g_g = jnp.tanh(gates[:, 2 * H2:3 * H2])
        o_g = jax.nn.sigmoid(gates[:, 3 * H2:4 * H2])
        cc = f_g * cc + i_g * g_g
        hc = o_g * jnp.tanh(cc)
        hpack_ref[pl.ds(i * N, N), :] = hc                     # one full-width store, off the dep chain

    # ---- 3. Re-align the bwd half to its true time index (once, off the chain):
    #         h(t) = [hpack[t][:, :H] | hpack[T-1-t][:, H:]] ----
    lane = jax.lax.broadcasted_iota(jnp.int32, (N, H2), 1)
    is_fwd_lane = lane < H
    h_rows = []
    for t in range(T):
        fwd_blk = hpack_ref[pl.ds(t * N, N), :]
        bwd_blk = hpack_ref[pl.ds((T - 1 - t) * N, N), :]
        h_rows.append(jnp.where(is_fwd_lane, fwd_blk, bwd_blk))     # [N, 2H]
    h_all = jnp.concatenate(h_rows, axis=0)                         # [T*N, 2H]

    # ---- 4. Attention pooling over time (scores on the MXU, block-wise softmax) ----
    u = jnp.tanh(jnp.dot(h_all.astype(jnp.bfloat16), wa_ref[...],
                         preferred_element_type=jnp.float32) + ba_ref[...])      # [T*N, A]
    # va replicated over 2H lanes -> every lane of s_b carries the same per-(t,n) score.
    s_b = jnp.dot(u, va_rep_ref[...], preferred_element_type=jnp.float32)        # [T*N, 2H]
    s_blocks = [s_b[t * N:(t + 1) * N, :] for t in range(T)]
    m = s_blocks[0]
    for t in range(1, T):
        m = jnp.maximum(m, s_blocks[t])
    num = jnp.zeros((N, H2), jnp.float32)
    den = jnp.zeros((N, H2), jnp.float32)
    for t in range(T):
        e_t = jnp.exp(s_blocks[t] - m)
        den = den + e_t
        num = num + e_t * h_rows[t]
    pooled = num / den                                              # [N, 2H] == desc_tensor

    # ---- 5. Fused row gather: out = desc_tensor[label_idx, :] as a one-hot matmul.
    #         NOTE: an out-of-range index yields an all-zero row (reference would raise). ----
    iota_n = jax.lax.broadcasted_iota(jnp.int32, (1, N), 1)
    onehot = jnp.concatenate(
        [(iota_n == idx_ref[l]).astype(jnp.float32) for l in range(L)], axis=0)  # [L, N]
    out_ref[...] = jnp.dot(onehot, pooled, preferred_element_type=jnp.float32)


# ---------------------------------------------------------------------------
# Wrapper: weight packing + pallas_call
# ---------------------------------------------------------------------------
def bilstm_attention_encode_and_gather(label_idx, x_tme, params):
    """x_tme: [T, N, E] float32 (time-major). Returns desc_tensor[label_idx, :]: [L, 2H] f32."""
    T, N, E = x_tme.shape
    H = params["wf_hh"].shape[0]
    A = params["wa"].shape[1]
    L = label_idx.shape[0]
    bf16, f32 = jnp.bfloat16, jnp.float32

    def pack_gate_dirs(wf, wb):
        # [K, 4H] (i,f,g,o) x 2 dirs -> [K, 8H] with columns [i_f|i_b|f_f|f_b|g_f|g_b|o_f|o_b]
        parts = []
        for g in range(4):
            parts.append(wf[:, g * H:(g + 1) * H])
            parts.append(wb[:, g * H:(g + 1) * H])
        return jnp.concatenate(parts, axis=1)

    # Block-structured input projection: rows 0:E act on x(t) (fwd gates only),
    # rows E:2E act on x(T-1-t) (bwd gates only).  Constant-folded under jit.
    zE = jnp.zeros((E, 4 * H), f32)
    w_ih_pack = pack_gate_dirs(jnp.concatenate([params["wf_ih"], zE], axis=0),
                               jnp.concatenate([zE, params["wb_ih"]], axis=0)).astype(bf16)
    # NOTE: real torch nn.LSTM checkpoints have b_ih + b_hh per direction; sum them into bf/bb here.
    b_pack = pack_gate_dirs(params["bf"], params["bb"]).astype(f32)
    # Block-diagonal recurrent weight so [h_f | h_b] only drives its own direction's gates.
    zH = jnp.zeros((H, 4 * H), f32)
    w_hh_pack = pack_gate_dirs(jnp.concatenate([params["wf_hh"], zH], axis=0),
                               jnp.concatenate([zH, params["wb_hh"]], axis=0)).astype(bf16)

    # Pre-combine fwd/bwd time rows off the chain: x_comb[t] = [x(t) | x(T-1-t)].
    x_comb = jnp.concatenate([x_tme, x_tme[::-1]], axis=-1)          # [T, N, 2E]
    x_flat = x_comb.reshape(T * N, 2 * E).astype(bf16)

    va_rep = jnp.broadcast_to(params["va"].reshape(A, 1), (A, 2 * H)).astype(f32)

    vmem = pl.BlockSpec(memory_space=pltpu.MemorySpace.VMEM)
    smem = pl.BlockSpec(memory_space=pltpu.MemorySpace.SMEM)

    # TODO(synk): at production label counts, add an N-grid with dimension_semantics=("parallel",)
    # and size the N-tile per generation (v7x: ~half the v6e tile, 64 MiB VMEM / 2 TCs;
    # v6e/v5e: raise vmem_limit_bytes above the 32/16 MiB scoped defaults).
    kernel = functools.partial(_bilstm_attn_gather_kernel, T=T, N=N, H=H)
    return pl.pallas_call(
        kernel,
        out_shape=jax.ShapeDtypeStruct((L, 2 * H), jnp.float32),
        in_specs=[smem] + [vmem] * 7,
        out_specs=vmem,
        scratch_shapes=[
            pltpu.VMEM((T * N, 8 * H), jnp.float32),   # gates_x (pre-combined fwd/bwd rows)
            pltpu.VMEM((T * N, 2 * H), jnp.float32),   # packed hidden states
        ],
    )(
        label_idx.astype(jnp.int32),
        x_flat,
        w_ih_pack,
        b_pack,
        w_hh_pack,
        params["wa"].astype(bf16),
        params["ba"].astype(f32),
        va_rep,
    )


# ---------------------------------------------------------------------------
# DescEncoder forward
# ---------------------------------------------------------------------------
def desc_encoder_forward(label_idx, params, desc_tokens):
    # Gather the description embeddings directly time-major (no separate transpose pass over HBM).
    x_tme = params["embed"][desc_tokens.T]                 # [T, N, E]
    return bilstm_attention_encode_and_gather(label_idx, x_tme, params)   # [L, 2H]
    # TODO(synk): variable-length descriptions (padding masks) are not modeled; fixed token length T.


# ---------------------------------------------------------------------------
# Pure-JAX reference (mirrors the PyTorch BiLSTM+attention text encoder + row gather)
# ---------------------------------------------------------------------------
def desc_encoder_reference(label_idx, params, desc_tokens):
    emb = params["embed"][desc_tokens]                     # [N, T, E]
    x = jnp.transpose(emb, (1, 0, 2))                      # [T, N, E]
    T, N, _ = x.shape
    H = params["wf_hh"].shape[0]

    def cell(x_t, h, c, w_ih, w_hh, b):
        g = x_t @ w_ih + h @ w_hh + b
        i = jax.nn.sigmoid(g[:, 0 * H:1 * H])
        f = jax.nn.sigmoid(g[:, 1 * H:2 * H])
        gg = jnp.tanh(g[:, 2 * H:3 * H])
        o = jax.nn.sigmoid(g[:, 3 * H:4 * H])
        c = f * c + i * gg
        return o * jnp.tanh(c), c

    hf = jnp.zeros((N, H)); cf = jnp.zeros((N, H))
    hb = jnp.zeros((N, H)); cb = jnp.zeros((N, H))
    hs_f = [None] * T
    hs_b = [None] * T
    for t in range(T):
        hf, cf = cell(x[t], hf, cf, params["wf_ih"], params["wf_hh"], params["bf"])
        hs_f[t] = hf
    for t in range(T - 1, -1, -1):
        hb, cb = cell(x[t], hb, cb, params["wb_ih"], params["wb_hh"], params["bb"])
        hs_b[t] = hb
    h = jnp.stack([jnp.concatenate([hs_f[t], hs_b[t]], axis=-1) for t in range(T)], axis=0)
    u = jnp.tanh(h @ params["wa"] + params["ba"])          # [T, N, A]
    s = jnp.sum(u * params["va"], axis=-1)                 # [T, N]
    alpha = jax.nn.softmax(s, axis=0)
    pooled = jnp.sum(alpha[:, :, None] * h, axis=0)        # [N, 2H]
    return pooled[label_idx, :]


# ---------------------------------------------------------------------------
# Deterministic parameter / input construction and smoke test
# ---------------------------------------------------------------------------
def make_params(key, vocab, E, H, A):
    ks = jax.random.split(key, 10)
    n = lambda k, s: (0.1 * jax.random.normal(k, s)).astype(jnp.float32)
    return {
        "embed": n(ks[0], (vocab, E)),
        "wf_ih": n(ks[1], (E, 4 * H)),
        "wf_hh": n(ks[2], (H, 4 * H)),
        "bf":    n(ks[3], (1, 4 * H)),
        "wb_ih": n(ks[4], (E, 4 * H)),
        "wb_hh": n(ks[5], (H, 4 * H)),
        "bb":    n(ks[6], (1, 4 * H)),
        "wa":    n(ks[7], (2 * H, A)),
        "ba":    n(ks[8], (1, A)),
        "va":    n(ks[9], (1, A)),
    }


if __name__ == "__main__":
    N_LABELS, T, E, H, A, VOCAB = 8, 8, 32, 64, 64, 50

    key = jax.random.PRNGKey(0)
    k_par, k_tok = jax.random.split(key)
    params = make_params(k_par, VOCAB, E, H, A)

    # Synthetic "description_dict": one fixed-length token sequence per label.
    desc_tokens = jax.random.randint(k_tok, (N_LABELS, T), 0, VOCAB, dtype=jnp.int32)
    label_idx = jnp.array([3, 0, 7, 2], dtype=jnp.int32)

    fwd = jax.jit(functools.partial(desc_encoder_forward,
                                    params=params, desc_tokens=desc_tokens))
    out = jax.block_until_ready(fwd(label_idx))

    ref = desc_encoder_reference(label_idx, params, desc_tokens)
    assert out.shape == (label_idx.shape[0], 2 * H), out.shape
    assert bool(jnp.all(jnp.isfinite(out)))
    assert bool(jnp.allclose(out, ref, atol=2e-2, rtol=2e-2)), \
        float(jnp.max(jnp.abs(out - ref)))
    print("KERNEL_OK")
</pallas_src>

<mosaic_0001>
module attributes {stable_mosaic.version = 11 : i64} {
  func.func @_bilstm_attn_gather_kernel(%arg0: memref<4xi32, #tpu.memory_space<smem>>, %arg1: memref<64x64xbf16, #tpu.memory_space<vmem>>, %arg2: memref<64x512xbf16, #tpu.memory_space<vmem>>, %arg3: memref<1x512xf32, #tpu.memory_space<vmem>>, %arg4: memref<128x512xbf16, #tpu.memory_space<vmem>>, %arg5: memref<128x64xbf16, #tpu.memory_space<vmem>>, %arg6: memref<1x64xf32, #tpu.memory_space<vmem>>, %arg7: memref<64x128xf32, #tpu.memory_space<vmem>>, %arg8: memref<4x128xf32, #tpu.memory_space<vmem>>, %arg9: memref<64x512xf32, #tpu.memory_space<vmem>>, %arg10: memref<64x128xf32, #tpu.memory_space<vmem>>) attributes {dimension_semantics = [], scalar_prefetch = 0 : i64, scratch_operands = 2 : i64, tpu.core_type = #tpu.core_type<tc>} {
    %c0 = arith.constant 0 : index
    %c0_0 = arith.constant 0 : index
    %0 = vector.load %arg1[%c0, %c0_0] : memref<64x64xbf16, #tpu.memory_space<vmem>>, vector<64x64xbf16>
    %c0_1 = arith.constant 0 : index
    %c0_2 = arith.constant 0 : index
    %1 = vector.load %arg2[%c0_1, %c0_2] : memref<64x512xbf16, #tpu.memory_space<vmem>>, vector<64x512xbf16>
    %cst = arith.constant dense<0.000000e+00> : vector<64x512xf32>
    %2 = tpu.matmul %0, %1, %cst {dimension_numbers = #tpu.dot_dimension_numbers<[1], [0], [0], [1], [0, 0, 1, 1], [], []>} : vector<64x64xbf16>, vector<64x512xbf16>, vector<64x512xf32> -> vector<64x512xf32>
    %c0_3 = arith.constant 0 : index
    %c0_4 = arith.constant 0 : index
    %3 = vector.load %arg3[%c0_3, %c0_4] : memref<1x512xf32, #tpu.memory_space<vmem>>, vector<1x512xf32>
    %4 = vector.broadcast %3 : vector<1x512xf32> to vector<64x512xf32>
    %5 = arith.addf %2, %4 : vector<64x512xf32>
    %c0_5 = arith.constant 0 : index
    %c0_6 = arith.constant 0 : index
    %6 = vector.load %arg9[%c0_5, %c0_6] : memref<64x512xf32, #tpu.memory_space<vmem>>, vector<64x512xf32>
    tpu.vector_store %arg9[%c0_5, %c0_6], %5 {strides = array<i32>} : memref<64x512xf32, #tpu.memory_space<vmem>>, vector<64x512xf32>,
    %c0_7 = arith.constant 0 : index
    %c0_8 = arith.constant 0 : index
    %7 = vector.load %arg4[%c0_7, %c0_8] : memref<128x512xbf16, #tpu.memory_space<vmem>>, vector<128x512xbf16>
    %cst_9 = arith.constant 0.000000e+00 : f32
    %8 = vector.broadcast %cst_9 : f32 to vector<8x128xf32>
    %cst_10 = arith.constant 0.000000e+00 : f32
    %9 = vector.broadcast %cst_10 : f32 to vector<8x128xf32>
    %c0_11 = arith.constant 0 : index
    %c0_12 = arith.constant 0 : index
    %10 = vector.load %arg9[%c0_11, %c0_12] : memref<64x512xf32, #tpu.memory_space<vmem>>, vector<8x512xf32>
    %11 = arith.truncf %8 : vector<8x128xf32> to vector<8x128xbf16>
    %cst_13 = arith.constant dense<0.000000e+00> : vector<8x512xf32>
    %12 = tpu.matmul %11, %7, %cst_13 {dimension_numbers = #tpu.dot_dimension_numbers<[1], [0], [0], [1], [0, 0, 1, 1], [], []>} : vector<8x128xbf16>, vector<128x512xbf16>, vector<8x512xf32> -> vector<8x512xf32>
    %13 = arith.addf %10, %12 : vector<8x512xf32>
    %14 = vector.extract_strided_slice %13 {offsets = [0, 0], sizes = [8, 128], strides = [1, 1]} : vector<8x512xf32> to vector<8x128xf32>
    %15 = arith.negf %14 : vector<8x128xf32>
    %16 = math.exp %15 : vector<8x128xf32>
    %cst_14 = arith.constant 1.000000e+00 : f32
    %17 = vector.broadcast %cst_14 : f32 to vector<8x128xf32>
    %18 = arith.addf %17, %16 : vector<8x128xf32>
    %19 = arith.divf %17, %18 : vector<8x128xf32>
    %20 = vector.extract_strided_slice %13 {offsets = [0, 128], sizes = [8, 128], strides = [1, 1]} : vector<8x512xf32> to vector<8x128xf32>
    %21 = arith.negf %20 : vector<8x128xf32>
    %22 = math.exp %21 : vector<8x128xf32>
    %cst_15 = arith.constant 1.000000e+00 : f32
    %23 = vector.broadcast %cst_15 : f32 to vector<8x128xf32>
    %24 = arith.addf %23, %22 : vector<8x128xf32>
    %25 = arith.divf %23, %24 : vector<8x128xf32>
    %26 = vector.extract_strided_slice %13 {offsets = [0, 256], sizes = [8, 128], strides = [1, 1]} : vector<8x512xf32> to vector<8x128xf32>
    %27 = math.tanh %26 : vector<8x128xf32>
    %28 = vector.extract_strided_slice %13 {offsets = [0, 384], sizes = [8, 128], strides = [1, 1]} : vector<8x512xf32> to vector<8x128xf32>
    %29 = arith.negf %28 : vector<8x128xf32>
    %30 = math.exp %29 : vector<8x128xf32>
    %cst_16 = arith.constant 1.000000e+00 : f32
    %31 = vector.broadcast %cst_16 : f32 to vector<8x128xf32>
    %32 = arith.addf %31, %30 : vector<8x128xf32>
    %33 = arith.divf %31, %32 : vector<8x128xf32>
    %34 = arith.mulf %25, %9 : vector<8x128xf32>
    %35 = arith.mulf %19, %27 : vector<8x128xf32>
    %36 = arith.addf %34, %35 : vector<8x128xf32>
    %37 = math.tanh %36 : vector<8x128xf32>
    %38 = arith.mulf %33, %37 : vector<8x128xf32>
    %c0_17 = arith.constant 0 : index
    %c0_18 = arith.constant 0 : index
    %39 = vector.load %arg10[%c0_17, %c0_18] : memref<64x128xf32, #tpu.memory_space<vmem>>, vector<8x128xf32>
    tpu.vector_store %arg10[%c0_17, %c0_18], %38 {strides = array<i32>} : memref<64x128xf32, #tpu.memory_space<vmem>>, vector<8x128xf32>,
    %c8 = arith.constant 8 : index
    %c0_19 = arith.constant 0 : index
    %40 = vector.load %arg9[%c8, %c0_19] : memref<64x512xf32, #tpu.memory_space<vmem>>, vector<8x512xf32>
    %41 = arith.truncf %38 : vector<8x128xf32> to vector<8x128xbf16>
    %cst_20 = arith.constant dense<0.000000e+00> : vector<8x512xf32>
    %42 = tpu.matmul %41, %7, %cst_20 {dimension_numbers = #tpu.dot_dimension_numbers<[1], [0], [0], [1], [0, 0, 1, 1], [], []>} : vector<8x128xbf16>, vector<128x512xbf16>, vector<8x512xf32> -> vector<8x512xf32>
    %43 = arith.addf %40, %42 : vector<8x512xf32>
    %44 = vector.extract_strided_slice %43 {offsets = [0, 0], sizes = [8, 128], strides = [1, 1]} : vector<8x512xf32> to vector<8x128xf32>
    %45 = arith.negf %44 : vector<8x128xf32>
    %46 = math.exp %45 : vector<8x128xf32>
    %cst_21 = arith.constant 1.000000e+00 : f32
    %47 = vector.broadcast %cst_21 : f32 to vector<8x128xf32>
    %48 = arith.addf %47, %46 : vector<8x128xf32>
    %49 = arith.divf %47, %48 : vector<8x128xf32>
    %50 = vector.extract_strided_slice %43 {offsets = [0, 128], sizes = [8, 128], strides = [1, 1]} : vector<8x512xf32> to vector<8x128xf32>
    %51 = arith.negf %50 : vector<8x128xf32>
    %52 = math.exp %51 : vector<8x128xf32>
    %cst_22 = arith.constant 1.000000e+00 : f32
    %53 = vector.broadcast %cst_22 : f32 to vector<8x128xf32>
    %54 = arith.addf %53, %52 : vector<8x128xf32>
    %55 = arith.divf %53, %54 : vector<8x128xf32>
    %56 = vector.extract_strided_slice %43 {offsets = [0, 256], sizes = [8, 128], strides = [1, 1]} : vector<8x512xf32> to vector<8x128xf32>
    %57 = math.tanh %56 : vector<8x128xf32>
    %58 = vector.extract_strided_slice %43 {offsets = [0, 384], sizes = [8, 128], strides = [1, 1]} : vector<8x512xf32> to vector<8x128xf32>
    %59 = arith.negf %58 : vector<8x128xf32>
    %60 = math.exp %59 : vector<8x128xf32>
    %cst_23 = arith.constant 1.000000e+00 : f32
    %61 = vector.broadcast %cst_23 : f32 to vector<8x128xf32>
    %62 = arith.addf %61, %60 : vector<8x128xf32>
    %63 = arith.divf %61, %62 : vector<8x128xf32>
    %64 = arith.mulf %55, %36 : vector<8x128xf32>
    %65 = arith.mulf %49, %57 : vector<8x128xf32>
    %66 = arith.addf %64, %65 : vector<8x128xf32>
    %67 = math.tanh %66 : vector<8x128xf32>
    %68 = arith.mulf %63, %67 : vector<8x128xf32>
    %c8_24 = arith.constant 8 : index
    %c0_25 = arith.constant 0 : index
    %69 = vector.load %arg10[%c8_24, %c0_25] : memref<64x128xf32, #tpu.memory_space<vmem>>, vector<8x128xf32>
    tpu.vector_store %arg10[%c8_24, %c0_25], %68 {strides = array<i32>} : memref<64x128xf32, #tpu.memory_space<vmem>>, vector<8x128xf32>,
    %c16 = arith.constant 16 : index
    %c0_26 = arith.constant 0 : index
    %70 = vector.load %arg9[%c16, %c0_26] : memref<64x512xf32, #tpu.memory_space<vmem>>, vector<8x512xf32>
    %71 = arith.truncf %68 : vector<8x128xf32> to vector<8x128xbf16>
    %cst_27 = arith.constant dense<0.000000e+00> : vector<8x512xf32>
    %72 = tpu.matmul %71, %7, %cst_27 {dimension_numbers = #tpu.dot_dimension_numbers<[1], [0], [0], [1], [0, 0, 1, 1], [], []>} : vector<8x128xbf16>, vector<128x512xbf16>, vector<8x512xf32> -> vector<8x512xf32>
    %73 = arith.addf %70, %72 : vector<8x512xf32>
    %74 = vector.extract_strided_slice %73 {offsets = [0, 0], sizes = [8, 128], strides = [1, 1]} : vector<8x512xf32> to vector<8x128xf32>
    %75 = arith.negf %74 : vector<8x128xf32>
    %76 = math.exp %75 : vector<8x128xf32>
    %cst_28 = arith.constant 1.000000e+00 : f32
    %77 = vector.broadcast %cst_28 : f32 to vector<8x128xf32>
    %78 = arith.addf %77, %76 : vector<8x128xf32>
    %79 = arith.divf %77, %78 : vector<8x128xf32>
    %80 = vector.extract_strided_slice %73 {offsets = [0, 128], sizes = [8, 128], strides = [1, 1]} : vector<8x512xf32> to vector<8x128xf32>
    %81 = arith.negf %80 : vector<8x128xf32>
    %82 = math.exp %81 : vector<8x128xf32>
    %cst_29 = arith.constant 1.000000e+00 : f32
    %83 = vector.broadcast %cst_29 : f32 to vector<8x128xf32>
    %84 = arith.addf %83, %82 : vector<8x128xf32>
    %85 = arith.divf %83, %84 : vector<8x128xf32>
    %86 = vector.extract_strided_slice %73 {offsets = [0, 256], sizes = [8, 128], strides = [1, 1]} : vector<8x512xf32> to vector<8x128xf32>
    %87 = math.tanh %86 : vector<8x128xf32>
    %88 = vector.extract_strided_slice %73 {offsets = [0, 384], sizes = [8, 128], strides = [1, 1]} : vector<8x512xf32> to vector<8x128xf32>
    %89 = arith.negf %88 : vector<8x128xf32>
    %90 = math.exp %89 : vector<8x128xf32>
    %cst_30 = arith.constant 1.000000e+00 : f32
    %91 = vector.broadcast %cst_30 : f32 to vector<8x128xf32>
    %92 = arith.addf %91, %90 : vector<8x128xf32>
    %93 = arith.divf %91, %92 : vector<8x128xf32>
    %94 = arith.mulf %85, %66 : vector<8x128xf32>
    %95 = arith.mulf %79, %87 : vector<8x128xf32>
    %96 = arith.addf %94, %95 : vector<8x128xf32>
    %97 = math.tanh %96 : vector<8x128xf32>
    %98 = arith.mulf %93, %97 : vector<8x128xf32>
    %c16_31 = arith.constant 16 : index
    %c0_32 = arith.constant 0 : index
    %99 = vector.load %arg10[%c16_31, %c0_32] : memref<64x128xf32, #tpu.memory_space<vmem>>, vector<8x128xf32>
    tpu.vector_store %arg10[%c16_31, %c0_32], %98 {strides = array<i32>} : memref<64x128xf32, #tpu.memory_space<vmem>>, vector<8x128xf32>,
    %c24 = arith.constant 24 : index
    %c0_33 = arith.constant 0 : index
    %100 = vector.load %arg9[%c24, %c0_33] : memref<64x512xf32, #tpu.memory_space<vmem>>, vector<8x512xf32>
    %101 = arith.truncf %98 : vector<8x128xf32> to vector<8x128xbf16>
    %cst_34 = arith.constant dense<0.000000e+00> : vector<8x512xf32>
    %102 = tpu.matmul %101, %7, %cst_34 {dimension_numbers = #tpu.dot_dimension_numbers<[1], [0], [0], [1], [0, 0, 1, 1], [], []>} : vector<8x128xbf16>, vector<128x512xbf16>, vector<8x512xf32> -> vector<8x512xf32>
    %103 = arith.addf %100, %102 : vector<8x512xf32>
    %104 = vector.extract_strided_slice %103 {offsets = [0, 0], sizes = [8, 128], strides = [1, 1]} : vector<8x512xf32> to vector<8x128xf32>
    %105 = arith.negf %104 : vector<8x128xf32>
    %106 = math.exp %105 : vector<8x128xf32>
    %cst_35 = arith.constant 1.000000e+00 : f32
    %107 = vector.broadcast %cst_35 : f32 to vector<8x128xf32>
    %108 = arith.addf %107, %106 : vector<8x128xf32>
    %109 = arith.divf %107, %108 : vector<8x128xf32>
    %110 = vector.extract_strided_slice %103 {offsets = [0, 128], sizes = [8, 128], strides = [1, 1]} : vector<8x512xf32> to vector<8x128xf32>
    %111 = arith.negf %110 : vector<8x128xf32>
    %112 = math.exp %111 : vector<8x128xf32>
    %cst_36 = arith.constant 1.000000e+00 : f32
    %113 = vector.broadcast %cst_36 : f32 to vector<8x128xf32>
    %114 = arith.addf %113, %112 : vector<8x128xf32>
    %115 = arith.divf %113, %114 : vector<8x128xf32>
    %116 = vector.extract_strided_slice %103 {offsets = [0, 256], sizes = [8, 128], strides = [1, 1]} : vector<8x512xf32> to vector<8x128xf32>
    %117 = math.tanh %116 : vector<8x128xf32>
    %118 = vector.extract_strided_slice %103 {offsets = [0, 384], sizes = [8, 128], strides = [1, 1]} : vector<8x512xf32> to vector<8x128xf32>
    %119 = arith.negf %118 : vector<8x128xf32>
    %120 = math.exp %119 : vector<8x128xf32>
    %cst_37 = arith.constant 1.000000e+00 : f32
    %121 = vector.broadcast %cst_37 : f32 to vector<8x128xf32>
    %122 = arith.addf %121, %120 : vector<8x128xf32>
    %123 = arith.divf %121, %122 : vector<8x128xf32>
    %124 = arith.mulf %115, %96 : vector<8x128xf32>
    %125 = arith.mulf %109, %117 : vector<8x128xf32>
    %126 = arith.addf %124, %125 : vector<8x128xf32>
    %127 = math.tanh %126 : vector<8x128xf32>
    %128 = arith.mulf %123, %127 : vector<8x128xf32>
    %c24_38 = arith.constant 24 : index
    %c0_39 = arith.constant 0 : index
    %129 = vector.load %arg10[%c24_38, %c0_39] : memref<64x128xf32, #tpu.memory_space<vmem>>, vector<8x128xf32>
    tpu.vector_store %arg10[%c24_38, %c0_39], %128 {strides = array<i32>} : memref<64x128xf32, #tpu.memory_space<vmem>>, vector<8x128xf32>,
    %c32 = arith.constant 32 : index
    %c0_40 = arith.constant 0 : index
    %130 = vector.load %arg9[%c32, %c0_40] : memref<64x512xf32, #tpu.memory_space<vmem>>, vector<8x512xf32>
    %131 = arith.truncf %128 : vector<8x128xf32> to vector<8x128xbf16>
    %cst_41 = arith.constant dense<0.000000e+00> : vector<8x512xf32>
    %132 = tpu.matmul %131, %7, %cst_41 {dimension_numbers = #tpu.dot_dimension_numbers<[1], [0], [0], [1], [0, 0, 1, 1], [], []>} : vector<8x128xbf16>, vector<128x512xbf16>, vector<8x512xf32> -> vector<8x512xf32>
    %133 = arith.addf %130, %132 : vector<8x512xf32>
    %134 = vector.extract_strided_slice %133 {offsets = [0, 0], sizes = [8, 128], strides = [1, 1]} : vector<8x512xf32> to vector<8x128xf32>
    %135 = arith.negf %134 : vector<8x128xf32>
    %136 = math.exp %135 : vector<8x128xf32>
    %cst_42 = arith.constant 1.000000e+00 : f32
    %137 = vector.broadcast %cst_42 : f32 to vector<8x128xf32>
    %138 = arith.addf %137, %136 : vector<8x128xf32>
    %139 = arith.divf %137, %138 : vector<8x128xf32>
    %140 = vector.extract_strided_slice %133 {offsets = [0, 128], sizes = [8, 128], strides = [1, 1]} : vector<8x512xf32> to vector<8x128xf32>
    %141 = arith.negf %140 : vector<8x128xf32>
    %142 = math.exp %141 : vector<8x128xf32>
    %cst_43 = arith.constant 1.000000e+00 : f32
    %143 = vector.broadcast %cst_43 : f32 to vector<8x128xf32>
    %144 = arith.addf %143, %142 : vector<8x128xf32>
    %145 = arith.divf %143, %144 : vector<8x128xf32>
    %146 = vector.extract_strided_slice %133 {offsets = [0, 256], sizes = [8, 128], strides = [1, 1]} : vector<8x512xf32> to vector<8x128xf32>
    %147 = math.tanh %146 : vector<8x128xf32>
    %148 = vector.extract_strided_slice %133 {offsets = [0, 384], sizes = [8, 128], strides = [1, 1]} : vector<8x512xf32> to vector<8x128xf32>
    %149 = arith.negf %148 : vector<8x128xf32>
    %150 = math.exp %149 : vector<8x128xf32>
    %cst_44 = arith.constant 1.000000e+00 : f32
    %151 = vector.broadcast %cst_44 : f32 to vector<8x128xf32>
    %152 = arith.addf %151, %150 : vector<8x128xf32>
    %153 = arith.divf %151, %152 : vector<8x128xf32>
    %154 = arith.mulf %145, %126 : vector<8x128xf32>
    %155 = arith.mulf %139, %147 : vector<8x128xf32>
    %156 = arith.addf %154, %155 : vector<8x128xf32>
    %157 = math.tanh %156 : vector<8x128xf32>
    %158 = arith.mulf %153, %157 : vector<8x128xf32>
    %c32_45 = arith.constant 32 : index
    %c0_46 = arith.constant 0 : index
    %159 = vector.load %arg10[%c32_45, %c0_46] : memref<64x128xf32, #tpu.memory_space<vmem>>, vector<8x128xf32>
    tpu.vector_store %arg10[%c32_45, %c0_46], %158 {strides = array<i32>} : memref<64x128xf32, #tpu.memory_space<vmem>>, vector<8x128xf32>,
    %c40 = arith.constant 40 : index
    %c0_47 = arith.constant 0 : index
    %160 = vector.load %arg9[%c40, %c0_47] : memref<64x512xf32, #tpu.memory_space<vmem>>, vector<8x512xf32>
    %161 = arith.truncf %158 : vector<8x128xf32> to vector<8x128xbf16>
    %cst_48 = arith.constant dense<0.000000e+00> : vector<8x512xf32>
    %162 = tpu.matmul %161, %7, %cst_48 {dimension_numbers = #tpu.dot_dimension_numbers<[1], [0], [0], [1], [0, 0, 1, 1], [], []>} : vector<8x128xbf16>, vector<128x512xbf16>, vector<8x512xf32> -> vector<8x512xf32>
    %163 = arith.addf %160, %162 : vector<8x512xf32>
    %164 = vector.extract_strided_slice %163 {offsets = [0, 0], sizes = [8, 128], strides = [1, 1]} : vector<8x512xf32> to vector<8x128xf32>
    %165 = arith.negf %164 : vector<8x128xf32>
    %166 = math.exp %165 : vector<8x128xf32>
    %cst_49 = arith.constant 1.000000e+00 : f32
    %167 = vector.broadcast %cst_49 : f32 to vector<8x128xf32>
    %168 = arith.addf %167, %166 : vector<8x128xf32>
    %169 = arith.divf %167, %168 : vector<8x128xf32>
    %170 = vector.extract_strided_slice %163 {offsets = [0, 128], sizes = [8, 128], strides = [1, 1]} : vector<8x512xf32> to vector<8x128xf32>
    %171 = arith.negf %170 : vector<8x128xf32>
    %172 = math.exp %171 : vector<8x128xf32>
    %cst_50 = arith.constant 1.000000e+00 : f32
    %173 = vector.broadcast %cst_50 : f32 to vector<8x128xf32>
    %174 = arith.addf %173, %172 : vector<8x128xf32>
    %175 = arith.divf %173, %174 : vector<8x128xf32>
    %176 = vector.extract_strided_slice %163 {offsets = [0, 256], sizes = [8, 128], strides = [1, 1]} : vector<8x512xf32> to vector<8x128xf32>
    %177 = math.tanh %176 : vector<8x128xf32>
    %178 = vector.extract_strided_slice %163 {offsets = [0, 384], sizes = [8, 128], strides = [1, 1]} : vector<8x512xf32> to vector<8x128xf32>
    %179 = arith.negf %178 : vector<8x128xf32>
    %180 = math.exp %179 : vector<8x128xf32>
    %cst_51 = arith.constant 1.000000e+00 : f32
    %181 = vector.broadcast %cst_51 : f32 to vector<8x128xf32>
    %182 = arith.addf %181, %180 : vector<8x128xf32>
    %183 = arith.divf %181, %182 : vector<8x128xf32>
    %184 = arith.mulf %175, %156 : vector<8x128xf32>
    %185 = arith.mulf %169, %177 : vector<8x128xf32>
    %186 = arith.addf %184, %185 : vector<8x128xf32>
    %187 = math.tanh %186 : vector<8x128xf32>
    %188 = arith.mulf %183, %187 : vector<8x128xf32>
    %c40_52 = arith.constant 40 : index
    %c0_53 = arith.constant 0 : index
    %189 = vector.load %arg10[%c40_52, %c0_53] : memref<64x128xf32, #tpu.memory_space<vmem>>, vector<8x128xf32>
    tpu.vector_store %arg10[%c40_52, %c0_53], %188 {strides = array<i32>} : memref<64x128xf32, #tpu.memory_space<vmem>>, vector<8x128xf32>,
    %c48 = arith.constant 48 : index
    %c0_54 = arith.constant 0 : index
    %190 = vector.load %arg9[%c48, %c0_54] : memref<64x512xf32, #tpu.memory_space<vmem>>, vector<8x512xf32>
    %191 = arith.truncf %188 : vector<8x128xf32> to vector<8x128xbf16>
    %cst_55 = arith.constant dense<0.000000e+00> : vector<8x512xf32>
    %192 = tpu.matmul %191, %7, %cst_55 {dimension_numbers = #tpu.dot_dimension_numbers<[1], [0], [0], [1], [0, 0, 1, 1], [], []>} : vector<8x128xbf16>, vector<128x512xbf16>, vector<8x512xf32> -> vector<8x512xf32>
    %193 = arith.addf %190, %192 : vector<8x512xf32>
    %194 = vector.extract_strided_slice %193 {offsets = [0, 0], sizes = [8, 128], strides = [1, 1]} : vector<8x512xf32> to vector<8x128xf32>
    %195 = arith.negf %194 : vector<8x128xf32>
    %196 = math.exp %195 : vector<8x128xf32>
    %cst_56 = arith.constant 1.000000e+00 : f32
    %197 = vector.broadcast %cst_56 : f32 to vector<8x128xf32>
    %198 = arith.addf %197, %196 : vector<8x128xf32>
    %199 = arith.divf %197, %198 : vector<8x128xf32>
    %200 = vector.extract_strided_slice %193 {offsets = [0, 128], sizes = [8, 128], strides = [1, 1]} : vector<8x512xf32> to vector<8x128xf32>
    %201 = arith.negf %200 : vector<8x128xf32>
    %202 = math.exp %201 : vector<8x128xf32>
    %cst_57 = arith.constant 1.000000e+00 : f32
    %203 = vector.broadcast %cst_57 : f32 to vector<8x128xf32>
    %204 = arith.addf %203, %202 : vector<8x128xf32>
    %205 = arith.divf %203, %204 : vector<8x128xf32>
    %206 = vector.extract_strided_slice %193 {offsets = [0, 256], sizes = [8, 128], strides = [1, 1]} : vector<8x512xf32> to vector<8x128xf32>
    %207 = math.tanh %206 : vector<8x128xf32>
    %208 = vector.extract_strided_slice %193 {offsets = [0, 384], sizes = [8, 128], strides = [1, 1]} : vector<8x512xf32> to vector<8x128xf32>
    %209 = arith.negf %208 : vector<8x128xf32>
    %210 = math.exp %209 : vector<8x128xf32>
    %cst_58 = arith.constant 1.000000e+00 : f32
    %211 = vector.broadcast %cst_58 : f32 to vector<8x128xf32>
    %212 = arith.addf %211, %210 : vector<8x128xf32>
    %213 = arith.divf %211, %212 : vector<8x128xf32>
    %214 = arith.mulf %205, %186 : vector<8x128xf32>
    %215 = arith.mulf %199, %207 : vector<8x128xf32>
    %216 = arith.addf %214, %215 : vector<8x128xf32>
    %217 = math.tanh %216 : vector<8x128xf32>
    %218 = arith.mulf %213, %217 : vector<8x128xf32>
    %c48_59 = arith.constant 48 : index
    %c0_60 = arith.constant 0 : index
    %219 = vector.load %arg10[%c48_59, %c0_60] : memref<64x128xf32, #tpu.memory_space<vmem>>, vector<8x128xf32>
    tpu.vector_store %arg10[%c48_59, %c0_60], %218 {strides = array<i32>} : memref<64x128xf32, #tpu.memory_space<vmem>>, vector<8x128xf32>,
    %c56 = arith.constant 56 : index
    %c0_61 = arith.constant 0 : index
    %220 = vector.load %arg9[%c56, %c0_61] : memref<64x512xf32, #tpu.memory_space<vmem>>, vector<8x512xf32>
    %221 = arith.truncf %218 : vector<8x128xf32> to vector<8x128xbf16>
    %cst_62 = arith.constant dense<0.000000e+00> : vector<8x512xf32>
    %222 = tpu.matmul %221, %7, %cst_62 {dimension_numbers = #tpu.dot_dimension_numbers<[1], [0], [0], [1], [0, 0, 1, 1], [], []>} : vector<8x128xbf16>, vector<128x512xbf16>, vector<8x512xf32> -> vector<8x512xf32>
    %223 = arith.addf %220, %222 : vector<8x512xf32>
    %224 = vector.extract_strided_slice %223 {offsets = [0, 0], sizes = [8, 128], strides = [1, 1]} : vector<8x512xf32> to vector<8x128xf32>
    %225 = arith.negf %224 : vector<8x128xf32>
    %226 = math.exp %225 : vector<8x128xf32>
    %cst_63 = arith.constant 1.000000e+00 : f32
    %227 = vector.broadcast %cst_63 : f32 to vector<8x128xf32>
    %228 = arith.addf %227, %226 : vector<8x128xf32>
    %229 = arith.divf %227, %228 : vector<8x128xf32>
    %230 = vector.extract_strided_slice %223 {offsets = [0, 128], sizes = [8, 128], strides = [1, 1]} : vector<8x512xf32> to vector<8x128xf32>
    %231 = arith.negf %230 : vector<8x128xf32>
    %232 = math.exp %231 : vector<8x128xf32>
    %cst_64 = arith.constant 1.000000e+00 : f32
    %233 = vector.broadcast %cst_64 : f32 to vector<8x128xf32>
    %234 = arith.addf %233, %232 : vector<8x128xf32>
    %235 = arith.divf %233, %234 : vector<8x128xf32>
    %236 = vector.extract_strided_slice %223 {offsets = [0, 256], sizes = [8, 128], strides = [1, 1]} : vector<8x512xf32> to vector<8x128xf32>
    %237 = math.tanh %236 : vector<8x128xf32>
    %238 = vector.extract_strided_slice %223 {offsets = [0, 384], sizes = [8, 128], strides = [1, 1]} : vector<8x512xf32> to vector<8x128xf32>
    %239 = arith.negf %238 : vector<8x128xf32>
    %240 = math.exp %239 : vector<8x128xf32>
    %cst_65 = arith.constant 1.000000e+00 : f32
    %241 = vector.broadcast %cst_65 : f32 to vector<8x128xf32>
    %242 = arith.addf %241, %240 : vector<8x128xf32>
    %243 = arith.divf %241, %242 : vector<8x128xf32>
    %244 = arith.mulf %235, %216 : vector<8x128xf32>
    %245 = arith.mulf %229, %237 : vector<8x128xf32>
    %246 = arith.addf %244, %245 : vector<8x128xf32>
    %247 = math.tanh %246 : vector<8x128xf32>
    %248 = arith.mulf %243, %247 : vector<8x128xf32>
    %c56_66 = arith.constant 56 : index
    %c0_67 = arith.constant 0 : index
    %249 = vector.load %arg10[%c56_66, %c0_67] : memref<64x128xf32, #tpu.memory_space<vmem>>, vector<8x128xf32>
    tpu.vector_store %arg10[%c56_66, %c0_67], %248 {strides = array<i32>} : memref<64x128xf32, #tpu.memory_space<vmem>>, vector<8x128xf32>,
    %250 = tpu.iota {dimensions = array<i32: 1>} : vector<8x128xi32>
    %c64_i32 = arith.constant 64 : i32
    %251 = vector.broadcast %c64_i32 : i32 to vector<8x128xi32>
    %252 = arith.cmpi slt, %250, %251 : vector<8x128xi32>
    %c0_68 = arith.constant 0 : index
    %c0_69 = arith.constant 0 : index
    %253 = vector.load %arg10[%c0_68, %c0_69] : memref<64x128xf32, #tpu.memory_space<vmem>>, vector<8x128xf32>
    %c56_70 = arith.constant 56 : index
    %c0_71 = arith.constant 0 : index
    %254 = vector.load %arg10[%c56_70, %c0_71] : memref<64x128xf32, #tpu.memory_space<vmem>>, vector<8x128xf32>
    %255 = arith.select %252, %253, %254 : vector<8x128xi1>, vector<8x128xf32>
    %c8_72 = arith.constant 8 : index
    %c0_73 = arith.constant 0 : index
    %256 = vector.load %arg10[%c8_72, %c0_73] : memref<64x128xf32, #tpu.memory_space<vmem>>, vector<8x128xf32>
    %c48_74 = arith.constant 48 : index
    %c0_75 = arith.constant 0 : index
    %257 = vector.load %arg10[%c48_74, %c0_75] : memref<64x128xf32, #tpu.memory_space<vmem>>, vector<8x128xf32>
    %258 = arith.select %252, %256, %257 : vector<8x128xi1>, vector<8x128xf32>
    %c16_76 = arith.constant 16 : index
    %c0_77 = arith.constant 0 : index
    %259 = vector.load %arg10[%c16_76, %c0_77] : memref<64x128xf32, #tpu.memory_space<vmem>>, vector<8x128xf32>
    %c40_78 = arith.constant 40 : index
    %c0_79 = arith.constant 0 : index
    %260 = vector.load %arg10[%c40_78, %c0_79] : memref<64x128xf32, #tpu.memory_space<vmem>>, vector<8x128xf32>
    %261 = arith.select %252, %259, %260 : vector<8x128xi1>, vector<8x128xf32>
    %c24_80 = arith.constant 24 : index
    %c0_81 = arith.constant 0 : index
    %262 = vector.load %arg10[%c24_80, %c0_81] : memref<64x128xf32, #tpu.memory_space<vmem>>, vector<8x128xf32>
    %c32_82 = arith.constant 32 : index
    %c0_83 = arith.constant 0 : index
    %263 = vector.load %arg10[%c32_82, %c0_83] : memref<64x128xf32, #tpu.memory_space<vmem>>, vector<8x128xf32>
    %264 = arith.select %252, %262, %263 : vector<8x128xi1>, vector<8x128xf32>
    %c32_84 = arith.constant 32 : index
    %c0_85 = arith.constant 0 : index
    %265 = vector.load %arg10[%c32_84, %c0_85] : memref<64x128xf32, #tpu.memory_space<vmem>>, vector<8x128xf32>
    %c24_86 = arith.constant 24 : index
    %c0_87 = arith.constant 0 : index
    %266 = vector.load %arg10[%c24_86, %c0_87] : memref<64x128xf32, #tpu.memory_space<vmem>>, vector<8x128xf32>
    %267 = arith.select %252, %265, %266 : vector<8x128xi1>, vector<8x128xf32>
    %c40_88 = arith.constant 40 : index
    %c0_89 = arith.constant 0 : index
    %268 = vector.load %arg10[%c40_88, %c0_89] : memref<64x128xf32, #tpu.memory_space<vmem>>, vector<8x128xf32>
    %c16_90 = arith.constant 16 : index
    %c0_91 = arith.constant 0 : index
    %269 = vector.load %arg10[%c16_90, %c0_91] : memref<64x128xf32, #tpu.memory_space<vmem>>, vector<8x128xf32>
    %270 = arith.select %252, %268, %269 : vector<8x128xi1>, vector<8x128xf32>
    %c48_92 = arith.constant 48 : index
    %c0_93 = arith.constant 0 : index
    %271 = vector.load %arg10[%c48_92, %c0_93] : memref<64x128xf32, #tpu.memory_space<vmem>>, vector<8x128xf32>
    %c8_94 = arith.constant 8 : index
    %c0_95 = arith.constant 0 : index
    %272 = vector.load %arg10[%c8_94, %c0_95] : memref<64x128xf32, #tpu.memory_space<vmem>>, vector<8x128xf32>
    %273 = arith.select %252, %271, %272 : vector<8x128xi1>, vector<8x128xf32>
    %c56_96 = arith.constant 56 : index
    %c0_97 = arith.constant 0 : index
    %274 = vector.load %arg10[%c56_96, %c0_97] : memref<64x128xf32, #tpu.memory_space<vmem>>, vector<8x128xf32>
    %c0_98 = arith.constant 0 : index
    %c0_99 = arith.constant 0 : index
    %275 = vector.load %arg10[%c0_98, %c0_99] : memref<64x128xf32, #tpu.memory_space<vmem>>, vector<8x128xf32>
    %276 = arith.select %252, %274, %275 : vector<8x128xi1>, vector<8x128xf32>
    %277 = tpu.concatenate %255, %258, %261, %264, %267, %270, %273, %276 in 0 : vector<8x128xf32>, vector<8x128xf32>, vector<8x128xf32>, vector<8x128xf32>, vector<8x128xf32>, vector<8x128xf32>, vector<8x128xf32>, vector<8x128xf32> -> vector<64x128xf32>
    %278 = arith.truncf %277 : vector<64x128xf32> to vector<64x128xbf16>
    %c0_100 = arith.constant 0 : index
    %c0_101 = arith.constant 0 : index
    %279 = vector.load %arg5[%c0_100, %c0_101] : memref<128x64xbf16, #tpu.memory_space<vmem>>, vector<128x64xbf16>
    %cst_102 = arith.constant dense<0.000000e+00> : vector<64x64xf32>
    %280 = tpu.matmul %278, %279, %cst_102 {dimension_numbers = #tpu.dot_dimension_numbers<[1], [0], [0], [1], [0, 0, 1, 1], [], []>} : vector<64x128xbf16>, vector<128x64xbf16>, vector<64x64xf32> -> vector<64x64xf32>
    %c0_103 = arith.constant 0 : index
    %c0_104 = arith.constant 0 : index
    %281 = vector.load %arg6[%c0_103, %c0_104] : memref<1x64xf32, #tpu.memory_space<vmem>>, vector<1x64xf32>
    %282 = vector.broadcast %281 : vector<1x64xf32> to vector<64x64xf32>
    %283 = arith.addf %280, %282 : vector<64x64xf32>
    %284 = math.tanh %283 : vector<64x64xf32>
    %c0_105 = arith.constant 0 : index
    %c0_106 = arith.constant 0 : index
    %285 = vector.load %arg7[%c0_105, %c0_106] : memref<64x128xf32, #tpu.memory_space<vmem>>, vector<64x128xf32>
    %cst_107 = arith.constant dense<0.000000e+00> : vector<64x128xf32>
    %286 = tpu.matmul %284, %285, %cst_107 {dimension_numbers = #tpu.dot_dimension_numbers<[1], [0], [0], [1], [0, 0, 1, 1], [], []>} : vector<64x64xf32>, vector<64x128xf32>, vector<64x128xf32> -> vector<64x128xf32>
    %287 = vector.extract_strided_slice %286 {offsets = [0, 0], sizes = [8, 128], strides = [1, 1]} : vector<64x128xf32> to vector<8x128xf32>
    %288 = vector.extract_strided_slice %286 {offsets = [8, 0], sizes = [8, 128], strides = [1, 1]} : vector<64x128xf32> to vector<8x128xf32>
    %289 = vector.extract_strided_slice %286 {offsets = [16, 0], sizes = [8, 128], strides = [1, 1]} : vector<64x128xf32> to vector<8x128xf32>
    %290 = vector.extract_strided_slice %286 {offsets = [24, 0], sizes = [8, 128], strides = [1, 1]} : vector<64x128xf32> to vector<8x128xf32>
    %291 = vector.extract_strided_slice %286 {offsets = [32, 0], sizes = [8, 128], strides = [1, 1]} : vector<64x128xf32> to vector<8x128xf32>
    %292 = vector.extract_strided_slice %286 {offsets = [40, 0], sizes = [8, 128], strides = [1, 1]} : vector<64x128xf32> to vector<8x128xf32>
    %293 = vector.extract_strided_slice %286 {offsets = [48, 0], sizes = [8, 128], strides = [1, 1]} : vector<64x128xf32> to vector<8x128xf32>
    %294 = vector.extract_strided_slice %286 {offsets = [56, 0], sizes = [8, 128], strides = [1, 1]} : vector<64x128xf32> to vector<8x128xf32>
    %295 = arith.maximumf %287, %288 : vector<8x128xf32>
    %296 = arith.maximumf %295, %289 : vector<8x128xf32>
    %297 = arith.maximumf %296, %290 : vector<8x128xf32>
    %298 = arith.maximumf %297, %291 : vector<8x128xf32>
    %299 = arith.maximumf %298, %292 : vector<8x128xf32>
    %300 = arith.maximumf %299, %293 : vector<8x128xf32>
    %301 = arith.maximumf %300, %294 : vector<8x128xf32>
    %cst_108 = arith.constant 0.000000e+00 : f32
    %302 = vector.broadcast %cst_108 : f32 to vector<8x128xf32>
    %cst_109 = arith.constant 0.000000e+00 : f32
    %303 = vector.broadcast %cst_109 : f32 to vector<8x128xf32>
    %304 = arith.subf %287, %301 : vector<8x128xf32>
    %305 = math.exp %304 : vector<8x128xf32>
    %306 = arith.addf %303, %305 : vector<8x128xf32>
    %307 = arith.mulf %305, %255 : vector<8x128xf32>
    %308 = arith.addf %302, %307 : vector<8x128xf32>
    %309 = arith.subf %288, %301 : vector<8x128xf32>
    %310 = math.exp %309 : vector<8x128xf32>
    %311 = arith.addf %306, %310 : vector<8x128xf32>
    %312 = arith.mulf %310, %258 : vector<8x128xf32>
    %313 = arith.addf %308, %312 : vector<8x128xf32>
    %314 = arith.subf %289, %301 : vector<8x128xf32>
    %315 = math.exp %314 : vector<8x128xf32>
    %316 = arith.addf %311, %315 : vector<8x128xf32>
    %317 = arith.mulf %315, %261 : vector<8x128xf32>
    %318 = arith.addf %313, %317 : vector<8x128xf32>
    %319 = arith.subf %290, %301 : vector<8x128xf32>
    %320 = math.exp %319 : vector<8x128xf32>
    %321 = arith.addf %316, %320 : vector<8x128xf32>
    %322 = arith.mulf %320, %264 : vector<8x128xf32>
    %323 = arith.addf %318, %322 : vector<8x128xf32>
    %324 = arith.subf %291, %301 : vector<8x128xf32>
    %325 = math.exp %324 : vector<8x128xf32>
    %326 = arith.addf %321, %325 : vector<8x128xf32>
    %327 = arith.mulf %325, %267 : vector<8x128xf32>
    %328 = arith.addf %323, %327 : vector<8x128xf32>
    %329 = arith.subf %292, %301 : vector<8x128xf32>
    %330 = math.exp %329 : vector<8x128xf32>
    %331 = arith.addf %326, %330 : vector<8x128xf32>
    %332 = arith.mulf %330, %270 : vector<8x128xf32>
    %333 = arith.addf %328, %332 : vector<8x128xf32>
    %334 = arith.subf %293, %301 : vector<8x128xf32>
    %335 = math.exp %334 : vector<8x128xf32>
    %336 = arith.addf %331, %335 : vector<8x128xf32>
    %337 = arith.mulf %335, %273 : vector<8x128xf32>
    %338 = arith.addf %333, %337 : vector<8x128xf32>
    %339 = arith.subf %294, %301 : vector<8x128xf32>
    %340 = math.exp %339 : vector<8x128xf32>
    %341 = arith.addf %336, %340 : vector<8x128xf32>
    %342 = arith.mulf %340, %276 : vector<8x128xf32>
    %343 = arith.addf %338, %342 : vector<8x128xf32>
    %344 = arith.divf %343, %341 : vector<8x128xf32>
    %345 = tpu.iota {dimensions = array<i32: 1>} : vector<1x8xi32>
    %c0_110 = arith.constant 0 : index
    %346 = memref.load %arg0[%c0_110] : memref<4xi32, #tpu.memory_space<smem>>
    %347 = vector.broadcast %346 : i32 to vector<1x8xi32>
    %348 = arith.cmpi eq, %345, %347 : vector<1x8xi32>
    %349 = arith.extui %348 : vector<1x8xi1> to vector<1x8xi32>
    %350 = arith.sitofp %349 : vector<1x8xi32> to vector<1x8xf32>
    %c1 = arith.constant 1 : index
    %351 = memref.load %arg0[%c1] : memref<4xi32, #tpu.memory_space<smem>>
    %352 = vector.broadcast %351 : i32 to vector<1x8xi32>
    %353 = arith.cmpi eq, %345, %352 : vector<1x8xi32>
    %354 = arith.extui %353 : vector<1x8xi1> to vector<1x8xi32>
    %355 = arith.sitofp %354 : vector<1x8xi32> to vector<1x8xf32>
    %c2 = arith.constant 2 : index
    %356 = memref.load %arg0[%c2] : memref<4xi32, #tpu.memory_space<smem>>
    %357 = vector.broadcast %356 : i32 to vector<1x8xi32>
    %358 = arith.cmpi eq, %345, %357 : vector<1x8xi32>
    %359 = arith.extui %358 : vector<1x8xi1> to vector<1x8xi32>
    %360 = arith.sitofp %359 : vector<1x8xi32> to vector<1x8xf32>
    %c3 = arith.constant 3 : index
    %361 = memref.load %arg0[%c3] : memref<4xi32, #tpu.memory_space<smem>>
    %362 = vector.broadcast %361 : i32 to vector<1x8xi32>
    %363 = arith.cmpi eq, %345, %362 : vector<1x8xi32>
    %364 = arith.extui %363 : vector<1x8xi1> to vector<1x8xi32>
    %365 = arith.sitofp %364 : vector<1x8xi32> to vector<1x8xf32>
    %366 = tpu.concatenate %350, %355, %360, %365 in 0 : vector<1x8xf32>, vector<1x8xf32>, vector<1x8xf32>, vector<1x8xf32> -> vector<4x8xf32>
    %cst_111 = arith.constant dense<0.000000e+00> : vector<4x128xf32>
    %367 = tpu.matmul %366, %344, %cst_111 {dimension_numbers = #tpu.dot_dimension_numbers<[1], [0], [0], [1], [0, 0, 1, 1], [], []>} : vector<4x8xf32>, vector<8x128xf32>, vector<4x128xf32> -> vector<4x128xf32>
    %c0_112 = arith.constant 0 : index
    %c0_113 = arith.constant 0 : index
    %368 = vector.load %arg8[%c0_112, %c0_113] : memref<4x128xf32, #tpu.memory_space<vmem>>, vector<4x128xf32>
    tpu.vector_store %arg8[%c0_112, %c0_113], %367 {strides = array<i32>} : memref<4x128xf32, #tpu.memory_space<vmem>>, vector<4x128xf32>,
    return
  }
}

</mosaic_0001>

<llo_original>
// kernel: desc_encoder_forward.1
$region0: #{desc_encoder_forward.1}
  #allocation0 [shape = 'u32[]', space=smem, size = 0x4, offset = 0x4, fixed_abs, tag = 'smem constant byte address 0x4 - core index']
  #allocation1 [shape = 'u32[144,128]{1,0:T(1,128)}', space=vmem, size = 0x12000, scoped, tag = 'internal scratch']
  #allocation2 [shape = 'f32[64,512]{1,0:T(8,128)}', space=vmem, size = 0x20000, scoped, tag = 'scratch operand']
  #allocation3 [shape = 'f32[64,128]{1,0:T(8,128)}', space=vmem, size = 0x8000, scoped, tag = 'scratch operand']
  %s0 = inlined_call_operand.vmem [shape: s32[4], index: 0, kind: input, shape index: {}]
  %s1 = inlined_call_operand.vmem [shape: bf16[64,64], index: 1, kind: input, shape index: {}]
  %s2 = inlined_call_operand.vmem [shape: bf16[64,512], index: 2, kind: input, shape index: {}]
  %s3 = inlined_call_operand.vmem [shape: f32[1,512], index: 3, kind: input, shape index: {}]
  %s4 = inlined_call_operand.vmem [shape: bf16[128,512], index: 4, kind: input, shape index: {}]
  %s5 = inlined_call_operand.vmem [shape: bf16[128,64], index: 5, kind: input, shape index: {}]
  %s6 = inlined_call_operand.vmem [shape: f32[1,64], index: 6, kind: input, shape index: {}]
  %s7 = inlined_call_operand.vmem [shape: f32[64,128], index: 7, kind: input, shape index: {}]
  %s8 = inlined_call_operand.hbm [shape: f32[4,128], index: 8, kind: output, shape index: {}]
  %s9 = sld [smem:[#allocation0]]
  $region46: #{desc_encoder_forward.1} parent=0
    _
  %s11 = ssub.s32 1, %s9
  %s12 = scalar_select 0, %s11, %s9
  $region1: #{desc_encoder_forward.1} parent=0
    #allocation4 [shape = 'u8[512]{0}', space=smem, size = 0x200, scoped, tag = 'input window, operand 0, single buffered']
    #allocation5 [shape = 's32[1]{0}', space=sflag, size = 0x4, scoped, tag = 'scoped memory for desc_encoder_forward.1']
    #allocation6 [shape = 's32[1]{0}', space=sflag, size = 0x4, scoped, tag = 'scoped memory for desc_encoder_forward.1']
    #allocation7 [shape = 'u8[2048]{0}', space=vmem, size = 0x800, scoped, tag = 'output window, operand 0, single buffered']
    %13 = vsyncpa [#allocation6], 0
    %14 = vsyncpa [#allocation5], 0
    // Predicated region
    $region2: #{desc_encoder_forward.1} parent=1 // pred_check
      _
    $region3: #{desc_encoder_forward.1} parent=1 // pred_check_branch
      %16 = sbr.rel (0) target = $region5
    $region4: #{desc_encoder_forward.1} parent=1 // pred_region
      %s18 = ssub.s32 16, 16
      %19 = vsyncadd [#allocation6], %s18
      %s21 = sshll.u32 %s0, 4
      %s22 = int_to_ptr.vmem [resolvable:$true] %s21
      %24 = dma.vmem_to_smem %s22, 16, [#allocation4], [#allocation6]
    $region5: #{desc_encoder_forward.1} parent=1 // pred_fallthru
      _
    // Predicated region
    $region6: #{desc_encoder_forward.1} parent=1 // pred_check
      _
    $region7: #{desc_encoder_forward.1} parent=1 // pred_check_branch
      %26 = sbr.rel (0) target = $region9
    $region8: #{desc_encoder_forward.1} parent=1 // pred_region
      _
    $region9: #{desc_encoder_forward.1} parent=1 // pred_fallthru
      _
    // Predicated region
    $region10: #{desc_encoder_forward.1} parent=1 // pred_check
      _
    $region11: #{desc_encoder_forward.1} parent=1 // pred_check_branch
      %28 = sbr.rel (0) target = $region13
    $region12: #{desc_encoder_forward.1} parent=1 // pred_region
      _
    $region13: #{desc_encoder_forward.1} parent=1 // pred_fallthru
      _
    // Predicated region
    $region14: #{desc_encoder_forward.1} parent=1 // pred_check
      _
    $region15: #{desc_encoder_forward.1} parent=1 // pred_check_branch
      %30 = sbr.rel (0) target = $region17
    $region16: #{desc_encoder_forward.1} parent=1 // pred_region
      _
    $region17: #{desc_encoder_forward.1} parent=1 // pred_fallthru
      _
    // Predicated region
    $region18: #{desc_encoder_forward.1} parent=1 // pred_check
      _
    $region19: #{desc_encoder_forward.1} parent=1 // pred_check_branch
      %32 = sbr.rel (0) target = $region21
    $region20: #{desc_encoder_forward.1} parent=1 // pred_region
      _
    $region21: #{desc_encoder_forward.1} parent=1 // pred_fallthru
      _
    // Predicated region
    $region22: #{desc_encoder_forward.1} parent=1 // pred_check
      _
    $region23: #{desc_encoder_forward.1} parent=1 // pred_check_branch
      %34 = sbr.rel (0) target = $region25
    $region24: #{desc_encoder_forward.1} parent=1 // pred_region
      _
    $region25: #{desc_encoder_forward.1} parent=1 // pred_fallthru
      _
    // Predicated region
    $region26: #{desc_encoder_forward.1} parent=1 // pred_check
      _
    $region27: #{desc_encoder_forward.1} parent=1 // pred_check_branch
      %36 = sbr.rel (0) target = $region29
    $region28: #{desc_encoder_forward.1} parent=1 // pred_region
      _
    $region29: #{desc_encoder_forward.1} parent=1 // pred_fallthru
      _
    // Predicated region
    $region30: #{desc_encoder_forward.1} parent=1 // pred_check
      _
    $region31: #{desc_encoder_forward.1} parent=1 // pred_check_branch
      %38 = sbr.rel (0) target = $region33
    $region32: #{desc_encoder_forward.1} parent=1 // pred_region
      _
    $region33: #{desc_encoder_forward.1} parent=1 // pred_fallthru
      _
    // Predicated region
    $region34: #{desc_encoder_forward.1} parent=1 // pred_check
      _
    $region35: #{desc_encoder_forward.1} parent=1 // pred_check_branch
      %40 = sbr.rel (0) target = $region37
    $region36: #{desc_encoder_forward.1} parent=1 // pred_region
      %41 = dma.done [#allocation6], 16
    $region37: #{desc_encoder_forward.1} parent=1 // pred_fallthru
      _
    %42 = sfence
    %v44 = vld [vmem:[%s1] sm:$0xf]
    %v45 = vld [vmem:[%s1 + $0x4] sm:$0xf]
    %v46 = vld [vmem:[%s1 + $0x8] sm:$0xf]
    %v47 = vld [vmem:[%s1 + $0xc] sm:$0xf]
    %v48 = vld [vmem:[%s1 + $0x10] sm:$0xf]
    %v49 = vld [vmem:[%s1 + $0x14] sm:$0xf]
    %v50 = vld [vmem:[%s1 + $0x18] sm:$0xf]
    %v51 = vld [vmem:[%s1 + $0x1c] sm:$0xf]
    %v52 = vld [vmem:[%s2] sm:$0xff]
    %v53 = vld [vmem:[%s2 + $0x8] sm:$0xff]
    %v54 = vld [vmem:[%s2 + $0x10] sm:$0xff]
    %v55 = vld [vmem:[%s2 + $0x18] sm:$0xff]
    %v56 = vld [vmem:[%s2 + $0x20] sm:$0xff]
    %v57 = vld [vmem:[%s2 + $0x28] sm:$0xff]
    %v58 = vld [vmem:[%s2 + $0x30] sm:$0xff]
    %v59 = vld [vmem:[%s2 + $0x38] sm:$0xff]
    %v60 = vld [vmem:[%s2 + $0x40] sm:$0xff]
    %v61 = vld [vmem:[%s2 + $0x48] sm:$0xff]
    %v62 = vld [vmem:[%s2 + $0x50] sm:$0xff]
    %v63 = vld [vmem:[%s2 + $0x58] sm:$0xff]
    %v64 = vld [vmem:[%s2 + $0x60] sm:$0xff]
    %v65 = vld [vmem:[%s2 + $0x68] sm:$0xff]
    %v66 = vld [vmem:[%s2 + $0x70] sm:$0xff]
    %v67 = vld [vmem:[%s2 + $0x78] sm:$0xff]
    %v68 = vld [vmem:[%s3] sm:$0xf]
    %v70 = vlaneseq
    %v71 = vshrl.u32 %v70, 7
    %v72 = vsub.s32 0, %v71
    %v73 = vrot.slane %v68, %v72
    %v74 = vlaneseq
    %v75 = vshrl.u32 %v74, 7
    %v76 = vsub.s32 1, %v75
    %v77 = vrot.slane %v68, %v76
    %v78 = vlaneseq
    %v79 = vshrl.u32 %v78, 7
    %v80 = vsub.s32 2, %v79
    %v81 = vrot.slane %v68, %v80
    %v82 = vlaneseq
    %v83 = vshrl.u32 %v82, 7
    %v84 = vsub.s32 3, %v83
    %v85 = vrot.slane %v68, %v84
    %v98 = vunpack.c.l.b16 %v44
    %v99 = vunpack.c.l.b16 %v45
    %v100 = vunpack.c.l.b16 %v46
    %v101 = vunpack.c.l.b16 %v47
    %v102 = vunpack.c.l.b16 %v48
    %v103 = vunpack.c.l.b16 %v49
    %v104 = vunpack.c.l.b16 %v50
    %v105 = vunpack.c.l.b16 %v51
    %v106 = vpack.c.b16 %v99, %v98
    %v107 = vpack.c.b16 %v101, %v100
    %v108 = vpack.c.b16 %v103, %v102
    %v109 = vpack.c.b16 %v105, %v104
    %v126 = vunpack.c.l.b16 %v52
    %v127 = vunpack.c.h.b16 %v52
    %v128 = vunpack.c.l.b16 %v53
    %v129 = vunpack.c.h.b16 %v53
    %v130 = vunpack.c.l.b16 %v54
    %v131 = vunpack.c.h.b16 %v54
    %v132 = vunpack.c.l.b16 %v55
    %v133 = vunpack.c.h.b16 %v55
    %v134 = vunpack.c.l.b16 %v56
    %v135 = vunpack.c.h.b16 %v56
    %v136 = vunpack.c.l.b16 %v57
    %v137 = vunpack.c.h.b16 %v57
    %v138 = vunpack.c.l.b16 %v58
    %v139 = vunpack.c.h.b16 %v58
    %v140 = vunpack.c.l.b16 %v59
    %v141 = vunpack.c.h.b16 %v59
    %v142 = vunpack.c.l.b16 %v60
    %v143 = vunpack.c.h.b16 %v60
    %v144 = vunpack.c.l.b16 %v61
    %v145 = vunpack.c.h.b16 %v61
    %v146 = vunpack.c.l.b16 %v62
    %v147 = vunpack.c.h.b16 %v62
    %v148 = vunpack.c.l.b16 %v63
    %v149 = vunpack.c.h.b16 %v63
    %v150 = vunpack.c.l.b16 %v64
    %v151 = vunpack.c.h.b16 %v64
    %v152 = vunpack.c.l.b16 %v65
    %v153 = vunpack.c.h.b16 %v65
    %v154 = vunpack.c.l.b16 %v66
    %v155 = vunpack.c.h.b16 %v66
    %v156 = vunpack.c.l.b16 %v67
    %v157 = vunpack.c.h.b16 %v67
    %v158 = vpack.c.b16 %v130, %v126
    %v159 = vpack.c.b16 %v131, %v127
    %v160 = vpack.c.b16 %v132, %v128
    %v161 = vpack.c.b16 %v133, %v129
    %v162 = vpack.c.b16 %v138, %v134
    %v163 = vpack.c.b16 %v139, %v135
    %v164 = vpack.c.b16 %v140, %v136
    %v165 = vpack.c.b16 %v141, %v137
    %v166 = vpack.c.b16 %v146, %v142
    %v167 = vpack.c.b16 %v147, %v143
    %v168 = vpack.c.b16 %v148, %v144
    %v169 = vpack.c.b16 %v149, %v145
    %v170 = vpack.c.b16 %v154, %v150
    %v171 = vpack.c.b16 %v155, %v151
    %v172 = vpack.c.b16 %v156, %v152
    %v173 = vpack.c.b16 %v157, %v153
    %vm190 = vcmask 523264
    %v192 = vsel %vm190, %v106, 0
    %v195 = vsel %vm190, %v107, 0
    %v198 = vsel %vm190, %v108, 0
    %v201 = vsel %vm190, %v109, 0
    %203 = vmatprep.subr.bf16.mxu0 %v159
    %204 = vmatpush1.bf16.msra.mxu0 %v158
    %205 = vmatprep.subr.bf16.mxu0 %v163
    %206 = vmatpush1.bf16.msra.mxu0 %v162
    %207 = vmatprep.subr.bf16.mxu0 %v167
    %208 = vmatpush1.bf16.msra.mxu0 %v166
    %209 = vmatprep.subr.bf16.mxu0 %v171
    %210 = vmatpush1.bf16.msra.mxu0 %v170
    %211 = vmatprep.subr.bf16.mxu0 0
    %212 = vmatpush1.bf16.msra.mxu0 0
    %213 = vmatprep.subr.bf16.mxu0 0
    %214 = vmatpush1.bf16.msra.mxu0 0
    %215 = vmatprep.subr.bf16.mxu0 0
    %216 = vmatpush1.bf16.msra.mxu0 0
    %217 = vmatprep.subr.bf16.mxu0 0
    %218 = vmatpush1.bf16.msra.mxu0 0
    %219 = vmatprep.subr.bf16.mxu0 0
    %220 = vmatpush1.bf16.msra.mxu0 0
    %221 = vmatprep.subr.bf16.mxu0 0
    %222 = vmatpush1.bf16.msra.mxu0 0
    %223 = vmatprep.subr.bf16.mxu0 0
    %224 = vmatpush1.bf16.msra.mxu0 0
    %225 = vmatprep.subr.bf16.mxu0 0
    %226 = vmatpush1.bf16.msra.mxu0 0
    %227 = vmatprep.subr.bf16.mxu0 0
    %228 = vmatpush1.bf16.msra.mxu0 0
    %229 = vmatprep.subr.bf16.mxu0 0
    %230 = vmatpush1.bf16.msra.mxu0 0
    %231 = vmatprep.subr.bf16.mxu0 0
    %232 = vmatpush1.bf16.msra.mxu0 0
    %233 = vmatprep.subr.bf16.mxu0 0
    %234 = vmatpush1.bf16.msra.mxu0 0
    %235 = vmatprep.mubr.bf16.mxu0 0
    %236 = vmatmul.mubr.bf16.gmra.mrb[0].mxu0 %v192
    %v237 = vpop.f32.mrb[0].mxu0
    %v238 = vadd.f32 %v73, %v237
    %v239 = vpop.f32.mrb[0].mxu0
    %v240 = vadd.f32 %v77, %v239
    %v241 = vpop.f32.mrb[0].mxu0
    %v242 = vadd.f32 %v73, %v241
    %v243 = vpop.f32.mrb[0].mxu0
    %v244 = vadd.f32 %v77, %v243
    %245 = vmatprep.mubr.bf16.mxu0 0
    %246 = vmatmul.mubr.bf16.gmra.mrb[0].mxu0 %v195
    %v247 = vpop.f32.mrb[0].mxu0
    %v248 = vadd.f32 %v73, %v247
    %v249 = vpop.f32.mrb[0].mxu0
    %v250 = vadd.f32 %v77, %v249
    %v251 = vpop.f32.mrb[0].mxu0
    %v252 = vadd.f32 %v73, %v251
    %v253 = vpop.f32.mrb[0].mxu0
    %v254 = vadd.f32 %v77, %v253
    %255 = vmatprep.mubr.bf16.mxu0 0
    %256 = vmatmul.mubr.bf16.gmra.mrb[0].mxu0 %v198
    %v257 = vpop.f32.mrb[0].mxu0
    %v258 = vadd.f32 %v73, %v257
    %v259 = vpop.f32.mrb[0].mxu0
    %v260 = vadd.f32 %v77, %v259
    %v261 = vpop.f32.mrb[0].mxu0
    %v262 = vadd.f32 %v73, %v261
    %v263 = vpop.f32.mrb[0].mxu0
    %v264 = vadd.f32 %v77, %v263
    %265 = vmatprep.mubr.bf16.mxu0 0
    %266 = vmatmul.mubr.bf16.gmra.mrb[0].mxu0 %v201
    %v267 = vpop.f32.mrb[0].mxu0
    %v268 = vadd.f32 %v73, %v267
    %v269 = vpop.f32.mrb[0].mxu0
    %v270 = vadd.f32 %v77, %v269
    %v271 = vpop.f32.mrb[0].mxu0
    %v272 = vadd.f32 %v73, %v271
    %v273 = vpop.f32.mrb[0].mxu0
    %v274 = vadd.f32 %v77, %v273
    %275 = vdwg.mxu0
    %276 = vmatprep.subr.bf16.mxu0 %v161
    %277 = vmatpush1.bf16.msra.mxu0 %v160
    %278 = vmatprep.subr.bf16.mxu0 %v165
    %279 = vmatpush1.bf16.msra.mxu0 %v164
    %280 = vmatprep.subr.bf16.mxu0 %v169
    %281 = vmatpush1.bf16.msra.mxu0 %v168
    %282 = vmatprep.subr.bf16.mxu0 %v173
    %283 = vmatpush1.bf16.msra.mxu0 %v172
    %284 = vmatprep.subr.bf16.mxu0 0
    %285 = vmatpush1.bf16.msra.mxu0 0
    %286 = vmatprep.subr.bf16.mxu0 0
    %287 = vmatpush1.bf16.msra.mxu0 0
    %288 = vmatprep.subr.bf16.mxu0 0
    %289 = vmatpush1.bf16.msra.mxu0 0
    %290 = vmatprep.subr.bf16.mxu0 0
    %291 = vmatpush1.bf16.msra.mxu0 0
    %292 = vmatprep.subr.bf16.mxu0 0
    %293 = vmatpush1.bf16.msra.mxu0 0
    %294 = vmatprep.subr.bf16.mxu0 0
    %295 = vmatpush1.bf16.msra.mxu0 0
    %296 = vmatprep.subr.bf16.mxu0 0
    %297 = vmatpush1.bf16.msra.mxu0 0
    %298 = vmatprep.subr.bf16.mxu0 0
    %299 = vmatpush1.bf16.msra.mxu0 0
    %300 = vmatprep.subr.bf16.mxu0 0
    %301 = vmatpush1.bf16.msra.mxu0 0
    %302 = vmatprep.subr.bf16.mxu0 0
    %303 = vmatpush1.bf16.msra.mxu0 0
    %304 = vmatprep.subr.bf16.mxu0 0
    %305 = vmatpush1.bf16.msra.mxu0 0
    %306 = vmatprep.subr.bf16.mxu0 0
    %307 = vmatpush1.bf16.msra.mxu0 0
    %308 = vmatprep.mubr.bf16.mxu0 0
    %309 = vmatmul.mubr.bf16.gmra.mrb[0].mxu0 %v192
    %v310 = vpop.f32.mrb[0].mxu0
    %v311 = vadd.f32 %v81, %v310
    %v312 = vpop.f32.mrb[0].mxu0
    %v313 = vadd.f32 %v85, %v312
    %v314 = vpop.f32.mrb[0].mxu0
    %v315 = vadd.f32 %v81, %v314
    %v316 = vpop.f32.mrb[0].mxu0
    %v317 = vadd.f32 %v85, %v316
    %318 = vmatprep.mubr.bf16.mxu0 0
    %319 = vmatmul.mubr.bf16.gmra.mrb[0].mxu0 %v195
    %v320 = vpop.f32.mrb[0].mxu0
    %v321 = vadd.f32 %v81, %v320
    %v322 = vpop.f32.mrb[0].mxu0
    %v323 = vadd.f32 %v85, %v322
    %v324 = vpop.f32.mrb[0].mxu0
    %v325 = vadd.f32 %v81, %v324
    %v326 = vpop.f32.mrb[0].mxu0
    %v327 = vadd.f32 %v85, %v326
    %328 = vmatprep.mubr.bf16.mxu0 0
    %329 = vmatmul.mubr.bf16.gmra.mrb[0].mxu0 %v198
    %v330 = vpop.f32.mrb[0].mxu0
    %v331 = vadd.f32 %v81, %v330
    %v332 = vpop.f32.mrb[0].mxu0
    %v333 = vadd.f32 %v85, %v332
    %v334 = vpop.f32.mrb[0].mxu0
    %v335 = vadd.f32 %v81, %v334
    %v336 = vpop.f32.mrb[0].mxu0
    %v337 = vadd.f32 %v85, %v336
    %338 = vmatprep.mubr.bf16.mxu0 0
    %339 = vmatmul.mubr.bf16.gmra.mrb[0].mxu0 %v201
    %v340 = vpop.f32.mrb[0].mxu0
    %v341 = vadd.f32 %v81, %v340
    %v342 = vpop.f32.mrb[0].mxu0
    %v343 = vadd.f32 %v85, %v342
    %v344 = vpop.f32.mrb[0].mxu0
    %v345 = vadd.f32 %v81, %v344
    %v346 = vpop.f32.mrb[0].mxu0
    %v347 = vadd.f32 %v85, %v346
    %348 = vdwg.mxu0
    %349 = vst [vmem:[#allocation2] sm:$0xff] %v238
    %350 = vst [vmem:[#allocation2 + $0x8] sm:$0xff] %v240
    %351 = vst [vmem:[#allocation2 + $0x10] sm:$0xff] %v311
    %352 = vst [vmem:[#allocation2 + $0x18] sm:$0xff] %v313
    %353 = vst [vmem:[#allocation2 + $0x20] sm:$0xff] %v242
    %354 = vst [vmem:[#allocation2 + $0x28] sm:$0xff] %v244
    %355 = vst [vmem:[#allocation2 + $0x30] sm:$0xff] %v315
    %356 = vst [vmem:[#allocation2 + $0x38] sm:$0xff] %v317
    %357 = vst [vmem:[#allocation2 + $0x40] sm:$0xff] %v248
    %358 = vst [vmem:[#allocation2 + $0x48] sm:$0xff] %v250
    %359 = vst [vmem:[#allocation2 + $0x50] sm:$0xff] %v321
    %360 = vst [vmem:[#allocation2 + $0x58] sm:$0xff] %v323
    %361 = vst [vmem:[#allocation2 + $0x60] sm:$0xff] %v252
    %362 = vst [vmem:[#allocation2 + $0x68] sm:$0xff] %v254
    %363 = vst [vmem:[#allocation2 + $0x70] sm:$0xff] %v325
    %364 = vst [vmem:[#allocation2 + $0x78] sm:$0xff] %v327
    %365 = vst [vmem:[#allocation2 + $0x80] sm:$0xff] %v258
    %366 = vst [vmem:[#allocation2 + $0x88] sm:$0xff] %v260
    %367 = vst [vmem:[#allocation2 + $0x90] sm:$0xff] %v331
    %368 = vst [vmem:[#allocation2 + $0x98] sm:$0xff] %v333
    %369 = vst [vmem:[#allocation2 + $0xa0] sm:$0xff] %v262
    %370 = vst [vmem:[#allocation2 + $0xa8] sm:$0xff] %v264
    %371 = vst [vmem:[#allocation2 + $0xb0] sm:$0xff] %v335
    %372 = vst [vmem:[#allocation2 + $0xb8] sm:$0xff] %v337
    %373 = vst [vmem:[#allocation2 + $0xc0] sm:$0xff] %v268
    %374 = vst [vmem:[#allocation2 + $0xc8] sm:$0xff] %v270
    %375 = vst [vmem:[#allocation2 + $0xd0] sm:$0xff] %v341
    %376 = vst [vmem:[#allocation2 + $0xd8] sm:$0xff] %v343
    %377 = vst [vmem:[#allocation2 + $0xe0] sm:$0xff] %v272
    %378 = vst [vmem:[#allocation2 + $0xe8] sm:$0xff] %v274
    %379 = vst [vmem:[#allocation2 + $0xf0] sm:$0xff] %v345
    %380 = vst [vmem:[#allocation2 + $0xf8] sm:$0xff] %v347
    %v381 = vld [vmem:[%s4] sm:$0xff]
    %v382 = vld [vmem:[%s4 + $0x8] sm:$0xff]
    %v383 = vld [vmem:[%s4 + $0x10] sm:$0xff]
    %v384 = vld [vmem:[%s4 + $0x18] sm:$0xff]
    %v385 = vld [vmem:[%s4 + $0x20] sm:$0xff]
    %v386 = vld [vmem:[%s4 + $0x28] sm:$0xff]
    %v387 = vld [vmem:[%s4 + $0x30] sm:$0xff]
    %v388 = vld [vmem:[%s4 + $0x38] sm:$0xff]
    %v389 = vld [vmem:[%s4 + $0x40] sm:$0xff]
    %v390 = vld [vmem:[%s4 + $0x48] sm:$0xff]
    %v391 = vld [vmem:[%s4 + $0x50] sm:$0xff]
    %v392 = vld [vmem:[%s4 + $0x58] sm:$0xff]
    %v393 = vld [vmem:[%s4 + $0x60] sm:$0xff]
    %v394 = vld [vmem:[%s4 + $0x68] sm:$0xff]
    %v395 = vld [vmem:[%s4 + $0x70] sm:$0xff]
    %v396 = vld [vmem:[%s4 + $0x78] sm:$0xff]
    %v397 = vld [vmem:[%s4 + $0x80] sm:$0xff]
    %v398 = vld [vmem:[%s4 + $0x88] sm:$0xff]
    %v399 = vld [vmem:[%s4 + $0x90] sm:$0xff]
    %v400 = vld [vmem:[%s4 + $0x98] sm:$0xff]
    %v401 = vld [vmem:[%s4 + $0xa0] sm:$0xff]
    %v402 = vld [vmem:[%s4 + $0xa8] sm:$0xff]
    %v403 = vld [vmem:[%s4 + $0xb0] sm:$0xff]
    %v404 = vld [vmem:[%s4 + $0xb8] sm:$0xff]
    %v405 = vld [vmem:[%s4 + $0xc0] sm:$0xff]
    %v406 = vld [vmem:[%s4 + $0xc8] sm:$0xff]
    %v407 = vld [vmem:[%s4 + $0xd0] sm:$0xff]
    %v408 = vld [vmem:[%s4 + $0xd8] sm:$0xff]
    %v409 = vld [vmem:[%s4 + $0xe0] sm:$0xff]
    %v410 = vld [vmem:[%s4 + $0xe8] sm:$0xff]
    %v411 = vld [vmem:[%s4 + $0xf0] sm:$0xff]
    %v412 = vld [vmem:[%s4 + $0xf8] sm:$0xff]
    %v413 = vld [vmem:[#allocation2] sm:$0xff]
    %v414 = vld [vmem:[#allocation2 + $0x8] sm:$0xff]
    %v415 = vld [vmem:[#allocation2 + $0x10] sm:$0xff]
    %v416 = vld [vmem:[#allocation2 + $0x18] sm:$0xff]
    %v449 = vunpack.c.l.b16 %v381
    %v450 = vunpack.c.h.b16 %v381
    %v451 = vunpack.c.l.b16 %v382
    %v452 = vunpack.c.h.b16 %v382
    %v453 = vunpack.c.l.b16 %v383
    %v454 = vunpack.c.h.b16 %v383
    %v455 = vunpack.c.l.b16 %v384
    %v456 = vunpack.c.h.b16 %v384
    %v457 = vunpack.c.l.b16 %v385
    %v458 = vunpack.c.h.b16 %v385
    %v459 = vunpack.c.l.b16 %v386
    %v460 = vunpack.c.h.b16 %v386
    %v461 = vunpack.c.l.b16 %v387
    %v462 = vunpack.c.h.b16 %v387
    %v463 = vunpack.c.l.b16 %v388
    %v464 = vunpack.c.h.b16 %v388
    %v465 = vunpack.c.l.b16 %v389
    %v466 = vunpack.c.h.b16 %v389
    %v467 = vunpack.c.l.b16 %v390
    %v468 = vunpack.c.h.b16 %v390
    %v469 = vunpack.c.l.b16 %v391
    %v470 = vunpack.c.h.b16 %v391
    %v471 = vunpack.c.l.b16 %v392
    %v472 = vunpack.c.h.b16 %v392
    %v473 = vunpack.c.l.b16 %v393
    %v474 = vunpack.c.h.b16 %v393
    %v475 = vunpack.c.l.b16 %v394
    %v476 = vunpack.c.h.b16 %v394
    %v477 = vunpack.c.l.b16 %v395
    %v478 = vunpack.c.h.b16 %v395
    %v479 = vunpack.c.l.b16 %v396
    %v480 = vunpack.c.h.b16 %v396
    %v481 = vunpack.c.l.b16 %v397
    %v482 = vunpack.c.h.b16 %v397
    %v483 = vunpack.c.l.b16 %v398
    %v484 = vunpack.c.h.b16 %v398
    %v485 = vunpack.c.l.b16 %v399
    %v486 = vunpack.c.h.b16 %v399
    %v487 = vunpack.c.l.b16 %v400
    %v488 = vunpack.c.h.b16 %v400
    %v489 = vunpack.c.l.b16 %v401
    %v490 = vunpack.c.h.b16 %v401
    %v491 = vunpack.c.l.b16 %v402
    %v492 = vunpack.c.h.b16 %v402
    %v493 = vunpack.c.l.b16 %v403
    %v494 = vunpack.c.h.b16 %v403
    %v495 = vunpack.c.l.b16 %v404
    %v496 = vunpack.c.h.b16 %v404
    %v497 = vunpack.c.l.b16 %v405
    %v498 = vunpack.c.h.b16 %v405
    %v499 = vunpack.c.l.b16 %v406
    %v500 = vunpack.c.h.b16 %v406
    %v501 = vunpack.c.l.b16 %v407
    %v502 = vunpack.c.h.b16 %v407
    %v503 = vunpack.c.l.b16 %v408
    %v504 = vunpack.c.h.b16 %v408
    %v505 = vunpack.c.l.b16 %v409
    %v506 = vunpack.c.h.b16 %v409
    %v507 = vunpack.c.l.b16 %v410
    %v508 = vunpack.c.h.b16 %v410
    %v509 = vunpack.c.l.b16 %v411
    %v510 = vunpack.c.h.b16 %v411
    %v511 = vunpack.c.l.b16 %v412
    %v512 = vunpack.c.h.b16 %v412
    %v513 = vpack.c.b16 %v453, %v449
    %v514 = vpack.c.b16 %v454, %v450
    %v515 = vpack.c.b16 %v455, %v451
    %v516 = vpack.c.b16 %v456, %v452
    %v517 = vpack.c.b16 %v461, %v457
    %v518 = vpack.c.b16 %v462, %v458
    %v519 = vpack.c.b16 %v463, %v459
    %v520 = vpack.c.b16 %v464, %v460
    %v521 = vpack.c.b16 %v469, %v465
    %v522 = vpack.c.b16 %v470, %v466
    %v523 = vpack.c.b16 %v471, %v467
    %v524 = vpack.c.b16 %v472, %v468
    %v525 = vpack.c.b16 %v477, %v473
    %v526 = vpack.c.b16 %v478, %v474
    %v527 = vpack.c.b16 %v479, %v475
    %v528 = vpack.c.b16 %v480, %v476
    %v529 = vpack.c.b16 %v485, %v481
    %v530 = vpack.c.b16 %v486, %v482
    %v531 = vpack.c.b16 %v487, %v483
    %v532 = vpack.c.b16 %v488, %v484
    %v533 = vpack.c.b16 %v493, %v489
    %v534 = vpack.c.b16 %v494, %v490
    %v535 = vpack.c.b16 %v495, %v491
    %v536 = vpack.c.b16 %v496, %v492
    %v537 = vpack.c.b16 %v501, %v497
    %v538 = vpack.c.b16 %v502, %v498
    %v539 = vpack.c.b16 %v503, %v499
    %v540 = vpack.c.b16 %v504, %v500
    %v541 = vpack.c.b16 %v509, %v505
    %v542 = vpack.c.b16 %v510, %v506
    %v543 = vpack.c.b16 %v511, %v507
    %v544 = vpack.c.b16 %v512, %v508
    %577 = vmatprep.subr.bf16.mxu0 %v514
    %578 = vmatpush1.bf16.msra.mxu0 %v513
    %579 = vmatprep.subr.bf16.mxu0 %v518
    %580 = vmatpush1.bf16.msra.mxu0 %v517
    %581 = vmatprep.subr.bf16.mxu0 %v522
    %582 = vmatpush1.bf16.msra.mxu0 %v521
    %583 = vmatprep.subr.bf16.mxu0 %v526
    %584 = vmatpush1.bf16.msra.mxu0 %v525
    %585 = vmatprep.subr.bf16.mxu0 %v530
    %586 = vmatpush1.bf16.msra.mxu0 %v529
    %587 = vmatprep.subr.bf16.mxu0 %v534
    %588 = vmatpush1.bf16.msra.mxu0 %v533
    %589 = vmatprep.subr.bf16.mxu0 %v538
    %590 = vmatpush1.bf16.msra.mxu0 %v537
    %591 = vmatprep.subr.bf16.mxu0 %v542
    %592 = vmatpush1.bf16.msra.mxu0 %v541
    %593 = vmatprep.subr.bf16.mxu0 0
    %594 = vmatpush1.bf16.msra.mxu0 0
    %595 = vmatprep.subr.bf16.mxu0 0
    %596 = vmatpush1.bf16.msra.mxu0 0
    %597 = vmatprep.subr.bf16.mxu0 0
    %598 = vmatpush1.bf16.msra.mxu0 0
    %599 = vmatprep.subr.bf16.mxu0 0
    %600 = vmatpush1.bf16.msra.mxu0 0
    %601 = vmatprep.subr.bf16.mxu0 0
    %602 = vmatpush1.bf16.msra.mxu0 0
    %603 = vmatprep.subr.bf16.mxu0 0
    %604 = vmatpush1.bf16.msra.mxu0 0
    %605 = vmatprep.subr.bf16.mxu0 0
    %606 = vmatpush1.bf16.msra.mxu0 0
    %607 = vmatprep.subr.bf16.mxu0 0
    %608 = vmatpush1.bf16.msra.mxu0 0
    %609 = vmatprep.mubr.bf16.mxu0 0
    %610 = vmatmul.mubr.bf16.gmra.mrb[0].mxu0 0
    %v611 = vpop.f32.mrb[0].mxu0
    %v612 = vadd.f32 0.0, %v611
    %v613 = vpop.f32.mrb[0].mxu0
    %v614 = vadd.f32 0.0, %v613
    %v615 = vpop.f32.mrb[0].mxu0
    %v616 = vpop.f32.mrb[0].mxu0
    %617 = vdwg.mxu0
    %618 = vmatprep.subr.bf16.mxu0 %v516
    %619 = vmatpush1.bf16.msra.mxu0 %v515
    %620 = vmatprep.subr.bf16.mxu0 %v520
    %621 = vmatpush1.bf16.msra.mxu0 %v519
    %622 = vmatprep.subr.bf16.mxu0 %v524
    %623 = vmatpush1.bf16.msra.mxu0 %v523
    %624 = vmatprep.subr.bf16.mxu0 %v528
    %625 = vmatpush1.bf16.msra.mxu0 %v527
    %626 = vmatprep.subr.bf16.mxu0 %v532
    %627 = vmatpush1.bf16.msra.mxu0 %v531
    %628 = vmatprep.subr.bf16.mxu0 %v536
    %629 = vmatpush1.bf16.msra.mxu0 %v535
    %630 = vmatprep.subr.bf16.mxu0 %v540
    %631 = vmatpush1.bf16.msra.mxu0 %v539
    %632 = vmatprep.subr.bf16.mxu0 %v544
    %633 = vmatpush1.bf16.msra.mxu0 %v543
    %634 = vmatprep.subr.bf16.mxu0 0
    %635 = vmatpush1.bf16.msra.mxu0 0
    %636 = vmatprep.subr.bf16.mxu0 0
    %637 = vmatpush1.bf16.msra.mxu0 0
    %638 = vmatprep.subr.bf16.mxu0 0
    %639 = vmatpush1.bf16.msra.mxu0 0
    %640 = vmatprep.subr.bf16.mxu0 0
    %641 = vmatpush1.bf16.msra.mxu0 0
    %642 = vmatprep.subr.bf16.mxu0 0
    %643 = vmatpush1.bf16.msra.mxu0 0
    %644 = vmatprep.subr.bf16.mxu0 0
    %645 = vmatpush1.bf16.msra.mxu0 0
    %646 = vmatprep.subr.bf16.mxu0 0
    %647 = vmatpush1.bf16.msra.mxu0 0
    %648 = vmatprep.subr.bf16.mxu0 0
    %649 = vmatpush1.bf16.msra.mxu0 0
    %650 = vmatprep.mubr.bf16.mxu0 0
    %651 = vmatmul.mubr.bf16.gmra.mrb[0].mxu0 0
    %v652 = vpop.f32.mrb[0].mxu0
    %v653 = vadd.f32 0.0, %v652
    %v654 = vpop.f32.mrb[0].mxu0
    %v655 = vadd.f32 0.0, %v654
    %v656 = vpop.f32.mrb[0].mxu0
    %v657 = vpop.f32.mrb[0].mxu0
    %658 = vdwg.mxu0
    %v659 = vadd.f32 %v413, %v612
    %v660 = vadd.f32 %v414, %v614
    %v661 = vadd.f32 %v415, %v653
    %v662 = vadd.f32 %v416, %v655
    %v663 = vxor.u32 %v659, 2147483648
    %v664 = vmul.f32 %v663, 1.442695
    %v665 = vpow.pop %v664
    %v666 = vadd.f32 %v665, 1.0
    %v667 = vrcp.pop %v666
    %v668 = vmul.f32 1.0, %v667
    %v669 = vxor.u32 %v660, 2147483648
    %v670 = vmul.f32 %v669, 1.442695
    %v671 = vpow.pop %v670
    %v672 = vadd.f32 %v671, 1.0
    %v673 = vrcp.pop %v672
    %v674 = vmul.f32 1.0, %v673
    %v675 = vtanh.pop %v661
    %v676 = vxor.u32 %v662, 2147483648
    %v677 = vmul.f32 %v676, 1.442695
    %v678 = vpow.pop %v677
    %v679 = vadd.f32 %v678, 1.0
    %v680 = vrcp.pop %v679
    %v681 = vmul.f32 1.0, %v680
    %v682 = vmul.f32 %v674, 0.0
    %v683 = vmul.f32 %v668, %v675
    %v684 = vadd.f32 %v682, %v683
    %v685 = vtanh.pop %v684
    %v686 = vmul.f32 %v681, %v685
    %687 = vst [vmem:[#allocation3] sm:$0xff] %v686
    %v688 = vld [vmem:[#allocation2 + $0x20] sm:$0xff]
    %v689 = vld [vmem:[#allocation2 + $0x28] sm:$0xff]
    %v690 = vld [vmem:[#allocation2 + $0x30] sm:$0xff]
    %v691 = vld [vmem:[#allocation2 + $0x38] sm:$0xff]
    %v692 = vpack.c.bf16 %v686, %v686
    %693 = vmatprep.subr.bf16.mxu0 %v514
    %694 = vmatpush1.bf16.msra.mxu0 %v513
    %695 = vmatprep.subr.bf16.mxu0 %v518
    %696 = vmatpush1.bf16.msra.mxu0 %v517
    %697 = vmatprep.subr.bf16.mxu0 %v522
    %698 = vmatpush1.bf16.msra.mxu0 %v521
    %699 = vmatprep.subr.bf16.mxu0 %v526
    %700 = vmatpush1.bf16.msra.mxu0 %v525
    %701 = vmatprep.subr.bf16.mxu0 %v530
    %702 = vmatpush1.bf16.msra.mxu0 %v529
    %703 = vmatprep.subr.bf16.mxu0 %v534
    %704 = vmatpush1.bf16.msra.mxu0 %v533
    %705 = vmatprep.subr.bf16.mxu0 %v538
    %706 = vmatpush1.bf16.msra.mxu0 %v537
    %707 = vmatprep.subr.bf16.mxu0 %v542
    %708 = vmatpush1.bf16.msra.mxu0 %v541
    %709 = vmatprep.subr.bf16.mxu0 0
    %710 = vmatpush1.bf16.msra.mxu0 0
    %711 = vmatprep.subr.bf16.mxu0 0
    %712 = vmatpush1.bf16.msra.mxu0 0
    %713 = vmatprep.subr.bf16.mxu0 0
    %714 = vmatpush1.bf16.msra.mxu0 0
    %715 = vmatprep.subr.bf16.mxu0 0
    %716 = vmatpush1.bf16.msra.mxu0 0
    %717 = vmatprep.subr.bf16.mxu0 0
    %718 = vmatpush1.bf16.msra.mxu0 0
    %719 = vmatprep.subr.bf16.mxu0 0
    %720 = vmatpush1.bf16.msra.mxu0 0
    %721 = vmatprep.subr.bf16.mxu0 0
    %722 = vmatpush1.bf16.msra.mxu0 0
    %723 = vmatprep.subr.bf16.mxu0 0
    %724 = vmatpush1.bf16.msra.mxu0 0
    %725 = vmatprep.mubr.bf16.mxu0 0
    %726 = vmatmul.mubr.bf16.gmra.mrb[0].mxu0 %v692
    %v727 = vpop.f32.mrb[0].mxu0
    %v728 = vadd.f32 0.0, %v727
    %v729 = vpop.f32.mrb[0].mxu0
    %v730 = vadd.f32 0.0, %v729
    %v731 = vpop.f32.mrb[0].mxu0
    %v732 = vpop.f32.mrb[0].mxu0
    %733 = vdwg.mxu0
    %734 = vmatprep.subr.bf16.mxu0 %v516
    %735 = vmatpush1.bf16.msra.mxu0 %v515
    %736 = vmatprep.subr.bf16.mxu0 %v520
    %737 = vmatpush1.bf16.msra.mxu0 %v519
    %738 = vmatprep.subr.bf16.mxu0 %v524
    %739 = vmatpush1.bf16.msra.mxu0 %v523
    %740 = vmatprep.subr.bf16.mxu0 %v528
    %741 = vmatpush1.bf16.msra.mxu0 %v527
    %742 = vmatprep.subr.bf16.mxu0 %v532
    %743 = vmatpush1.bf16.msra.mxu0 %v531
    %744 = vmatprep.subr.bf16.mxu0 %v536
    %745 = vmatpush1.bf16.msra.mxu0 %v535
    %746 = vmatprep.subr.bf16.mxu0 %v540
    %747 = vmatpush1.bf16.msra.mxu0 %v539
    %748 = vmatprep.subr.bf16.mxu0 %v544
    %749 = vmatpush1.bf16.msra.mxu0 %v543
    %750 = vmatprep.subr.bf16.mxu0 0
    %751 = vmatpush1.bf16.msra.mxu0 0
    %752 = vmatprep.subr.bf16.mxu0 0
    %753 = vmatpush1.bf16.msra.mxu0 0
    %754 = vmatprep.subr.bf16.mxu0 0
    %755 = vmatpush1.bf16.msra.mxu0 0
    %756 = vmatprep.subr.bf16.mxu0 0
    %757 = vmatpush1.bf16.msra.mxu0 0
    %758 = vmatprep.subr.bf16.mxu0 0
    %759 = vmatpush1.bf16.msra.mxu0 0
    %760 = vmatprep.subr.bf16.mxu0 0
    %761 = vmatpush1.bf16.msra.mxu0 0
    %762 = vmatprep.subr.bf16.mxu0 0
    %763 = vmatpush1.bf16.msra.mxu0 0
    %764 = vmatprep.subr.bf16.mxu0 0
    %765 = vmatpush1.bf16.msra.mxu0 0
    %766 = vmatprep.mubr.bf16.mxu0 0
    %767 = vmatmul.mubr.bf16.gmra.mrb[0].mxu0 %v692
    %v768 = vpop.f32.mrb[0].mxu0
    %v769 = vadd.f32 0.0, %v768
    %v770 = vpop.f32.mrb[0].mxu0
    %v771 = vadd.f32 0.0, %v770
    %v772 = vpop.f32.mrb[0].mxu0
    %v773 = vpop.f32.mrb[0].mxu0
    %774 = vdwg.mxu0
    %v775 = vadd.f32 %v688, %v728
    %v776 = vadd.f32 %v689, %v730
    %v777 = vadd.f32 %v690, %v769
    %v778 = vadd.f32 %v691, %v771
    %v779 = vxor.u32 %v775, 2147483648
    %v780 = vmul.f32 %v779, 1.442695
    %v781 = vpow.pop %v780
    %v782 = vadd.f32 %v781, 1.0
    %v783 = vrcp.pop %v782
    %v784 = vmul.f32 1.0, %v783
    %v785 = vxor.u32 %v776, 2147483648
    %v786 = vmul.f32 %v785, 1.442695
    %v787 = vpow.pop %v786
    %v788 = vadd.f32 %v787, 1.0
    %v789 = vrcp.pop %v788
    %v790 = vmul.f32 1.0, %v789
    %v791 = vtanh.pop %v777
    %v792 = vxor.u32 %v778, 2147483648
    %v793 = vmul.f32 %v792, 1.442695
    %v794 = vpow.pop %v793
    %v795 = vadd.f32 %v794, 1.0
    %v796 = vrcp.pop %v795
    %v797 = vmul.f32 1.0, %v796
    %v798 = vmul.f32 %v790, %v684
    %v799 = vmul.f32 %v784, %v791
    %v800 = vadd.f32 %v798, %v799
    %v801 = vtanh.pop %v800
    %v802 = vmul.f32 %v797, %v801
    %803 = vst [vmem:[#allocation3 + $0x8] sm:$0xff] %v802
    %v804 = vld [vmem:[#allocation2 + $0x40] sm:$0xff]
    %v805 = vld [vmem:[#allocation2 + $0x48] sm:$0xff]
    %v806 = vld [vmem:[#allocation2 + $0x50] sm:$0xff]
    %v807 = vld [vmem:[#allocation2 + $0x58] sm:$0xff]
    %v808 = vpack.c.bf16 %v802, %v802
    %809 = vmatprep.subr.bf16.mxu0 %v514
    %810 = vmatpush1.bf16.msra.mxu0 %v513
    %811 = vmatprep.subr.bf16.mxu0 %v518
    %812 = vmatpush1.bf16.msra.mxu0 %v517
    %813 = vmatprep.subr.bf16.mxu0 %v522
    %814 = vmatpush1.bf16.msra.mxu0 %v521
    %815 = vmatprep.subr.bf16.mxu0 %v526
    %816 = vmatpush1.bf16.msra.mxu0 %v525
    %817 = vmatprep.subr.bf16.mxu0 %v530
    %818 = vmatpush1.bf16.msra.mxu0 %v529
    %819 = vmatprep.subr.bf16.mxu0 %v534
    %820 = vmatpush1.bf16.msra.mxu0 %v533
    %821 = vmatprep.subr.bf16.mxu0 %v538
    %822 = vmatpush1.bf16.msra.mxu0 %v537
    %823 = vmatprep.subr.bf16.mxu0 %v542
    %824 = vmatpush1.bf16.msra.mxu0 %v541
    %825 = vmatprep.subr.bf16.mxu0 0
    %826 = vmatpush1.bf16.msra.mxu0 0
    %827 = vmatprep.subr.bf16.mxu0 0
    %828 = vmatpush1.bf16.msra.mxu0 0
    %829 = vmatprep.subr.bf16.mxu0 0
    %830 = vmatpush1.bf16.msra.mxu0 0
    %831 = vmatprep.subr.bf16.mxu0 0
    %832 = vmatpush1.bf16.msra.mxu0 0
    %833 = vmatprep.subr.bf16.mxu0 0
    %834 = vmatpush1.bf16.msra.mxu0 0
    %835 = vmatprep.subr.bf16.mxu0 0
    %836 = vmatpush1.bf16.msra.mxu0 0
    %837 = vmatprep.subr.bf16.mxu0 0
    %838 = vmatpush1.bf16.msra.mxu0 0
    %839 = vmatprep.subr.bf16.mxu0 0
    %840 = vmatpush1.bf16.msra.mxu0 0
    %841 = vmatprep.mubr.bf16.mxu0 0
    %842 = vmatmul.mubr.bf16.gmra.mrb[0].mxu0 %v808
    %v843 = vpop.f32.mrb[0].mxu0
    %v844 = vadd.f32 0.0, %v843
    %v845 = vpop.f32.mrb[0].mxu0
    %v846 = vadd.f32 0.0, %v845
    %v847 = vpop.f32.mrb[0].mxu0
    %v848 = vpop.f32.mrb[0].mxu0
    %849 = vdwg.mxu0
    %850 = vmatprep.subr.bf16.mxu0 %v516
    %851 = vmatpush1.bf16.msra.mxu0 %v515
    %852 = vmatprep.subr.bf16.mxu0 %v520
    %853 = vmatpush1.bf16.msra.mxu0 %v519
    %854 = vmatprep.subr.bf16.mxu0 %v524
    %855 = vmatpush1.bf16.msra.mxu0 %v523
    %856 = vmatprep.subr.bf16.mxu0 %v528
    %857 = vmatpush1.bf16.msra.mxu0 %v527
    %858 = vmatprep.subr.bf16.mxu0 %v532
    %859 = vmatpush1.bf16.msra.mxu0 %v531
    %860 = vmatprep.subr.bf16.mxu0 %v536
    %861 = vmatpush1.bf16.msra.mxu0 %v535
    %862 = vmatprep.subr.bf16.mxu0 %v540
    %863 = vmatpush1.bf16.msra.mxu0 %v539
    %864 = vmatprep.subr.bf16.mxu0 %v544
    %865 = vmatpush1.bf16.msra.mxu0 %v543
    %866 = vmatprep.subr.bf16.mxu0 0
    %867 = vmatpush1.bf16.msra.mxu0 0
    %868 = vmatprep.subr.bf16.mxu0 0
    %869 = vmatpush1.bf16.msra.mxu0 0
    %870 = vmatprep.subr.bf16.mxu0 0
    %871 = vmatpush1.bf16.msra.mxu0 0
    %872 = vmatprep.subr.bf16.mxu0 0
    %873 = vmatpush1.bf16.msra.mxu0 0
    %874 = vmatprep.subr.bf16.mxu0 0
    %875 = vmatpush1.bf16.msra.mxu0 0
    %876 = vmatprep.subr.bf16.mxu0 0
    %877 = vmatpush1.bf16.msra.mxu0 0
    %878 = vmatprep.subr.bf16.mxu0 0
    %879 = vmatpush1.bf16.msra.mxu0 0
    %880 = vmatprep.subr.bf16.mxu0 0
    %881 = vmatpush1.bf16.msra.mxu0 0
    %882 = vmatprep.mubr.bf16.mxu0 0
    %883 = vmatmul.mubr.bf16.gmra.mrb[0].mxu0 %v808
    %v884 = vpop.f32.mrb[0].mxu0
    %v885 = vadd.f32 0.0, %v884
    %v886 = vpop.f32.mrb[0].mxu0
    %v887 = vadd.f32 0.0, %v886
    %v888 = vpop.f32.mrb[0].mxu0
    %v889 = vpop.f32.mrb[0].mxu0
    %890 = vdwg.mxu0
    %v891 = vadd.f32 %v804, %v844
    %v892 = vadd.f32 %v805, %v846
    %v893 = vadd.f32 %v806, %v885
    %v894 = vadd.f32 %v807, %v887
    %v895 = vxor.u32 %v891, 2147483648
    %v896 = vmul.f32 %v895, 1.442695
    %v897 = vpow.pop %v896
    %v898 = vadd.f32 %v897, 1.0
    %v899 = vrcp.pop %v898
    %v900 = vmul.f32 1.0, %v899
    %v901 = vxor.u32 %v892, 2147483648
    %v902 = vmul.f32 %v901, 1.442695
    %v903 = vpow.pop %v902
    %v904 = vadd.f32 %v903, 1.0
    %v905 = vrcp.pop %v904
    %v906 = vmul.f32 1.0, %v905
    %v907 = vtanh.pop %v893
    %v908 = vxor.u32 %v894, 2147483648
    %v909 = vmul.f32 %v908, 1.442695
    %v910 = vpow.pop %v909
    %v911 = vadd.f32 %v910, 1.0
    %v912 = vrcp.pop %v911
    %v913 = vmul.f32 1.0, %v912
    %v914 = vmul.f32 %v906, %v800
    %v915 = vmul.f32 %v900, %v907
    %v916 = vadd.f32 %v914, %v915
    %v917 = vtanh.pop %v916
    %v918 = vmul.f32 %v913, %v917
    %919 = vst [vmem:[#allocation3 + $0x10] sm:$0xff] %v918
    %v920 = vld [vmem:[#allocation2 + $0x60] sm:$0xff]
    %v921 = vld [vmem:[#allocation2 + $0x68] sm:$0xff]
    %v922 = vld [vmem:[#allocation2 + $0x70] sm:$0xff]
    %v923 = vld [vmem:[#allocation2 + $0x78] sm:$0xff]
    %v924 = vpack.c.bf16 %v918, %v918
    %925 = vmatprep.subr.bf16.mxu0 %v514
    %926 = vmatpush1.bf16.msra.mxu0 %v513
    %927 = vmatprep.subr.bf16.mxu0 %v518
    %928 = vmatpush1.bf16.msra.mxu0 %v517
    %929 = vmatprep.subr.bf16.mxu0 %v522
    %930 = vmatpush1.bf16.msra.mxu0 %v521
    %931 = vmatprep.subr.bf16.mxu0 %v526
    %932 = vmatpush1.bf16.msra.mxu0 %v525
    %933 = vmatprep.subr.bf16.mxu0 %v530
    %934 = vmatpush1.bf16.msra.mxu0 %v529
    %935 = vmatprep.subr.bf16.mxu0 %v534
    %936 = vmatpush1.bf16.msra.mxu0 %v533
    %937 = vmatprep.subr.bf16.mxu0 %v538
    %938 = vmatpush1.bf16.msra.mxu0 %v537
    %939 = vmatprep.subr.bf16.mxu0 %v542
    %940 = vmatpush1.bf16.msra.mxu0 %v541
    %941 = vmatprep.subr.bf16.mxu0 0
    %942 = vmatpush1.bf16.msra.mxu0 0
    %943 = vmatprep.subr.bf16.mxu0 0
    %944 = vmatpush1.bf16.msra.mxu0 0
    %945 = vmatprep.subr.bf16.mxu0 0
    %946 = vmatpush1.bf16.msra.mxu0 0
    %947 = vmatprep.subr.bf16.mxu0 0
    %948 = vmatpush1.bf16.msra.mxu0 0
    %949 = vmatprep.subr.bf16.mxu0 0
    %950 = vmatpush1.bf16.msra.mxu0 0
    %951 = vmatprep.subr.bf16.mxu0 0
    %952 = vmatpush1.bf16.msra.mxu0 0
    %953 = vmatprep.subr.bf16.mxu0 0
    %954 = vmatpush1.bf16.msra.mxu0 0
    %955 = vmatprep.subr.bf16.mxu0 0
    %956 = vmatpush1.bf16.msra.mxu0 0
    %957 = vmatprep.mubr.bf16.mxu0 0
    %958 = vmatmul.mubr.bf16.gmra.mrb[0].mxu0 %v924
    %v959 = vpop.f32.mrb[0].mxu0
    %v960 = vadd.f32 0.0, %v959
    %v961 = vpop.f32.mrb[0].mxu0
    %v962 = vadd.f32 0.0, %v961
    %v963 = vpop.f32.mrb[0].mxu0
    %v964 = vpop.f32.mrb[0].mxu0
    %965 = vdwg.mxu0
    %966 = vmatprep.subr.bf16.mxu0 %v516
    %967 = vmatpush1.bf16.msra.mxu0 %v515
    %968 = vmatprep.subr.bf16.mxu0 %v520
    %969 = vmatpush1.bf16.msra.mxu0 %v519
    %970 = vmatprep.subr.bf16.mxu0 %v524
    %971 = vmatpush1.bf16.msra.mxu0 %v523
    %972 = vmatprep.subr.bf16.mxu0 %v528
    %973 = vmatpush1.bf16.msra.mxu0 %v527
    %974 = vmatprep.subr.bf16.mxu0 %v532
    %975 = vmatpush1.bf16.msra.mxu0 %v531
    %976 = vmatprep.subr.bf16.mxu0 %v536
    %977 = vmatpush1.bf16.msra.mxu0 %v535
    %978 = vmatprep.subr.bf16.mxu0 %v540
    %979 = vmatpush1.bf16.msra.mxu0 %v539
    %980 = vmatprep.subr.bf16.mxu0 %v544
    %981 = vmatpush1.bf16.msra.mxu0 %v543
    %982 = vmatprep.subr.bf16.mxu0 0
    %983 = vmatpush1.bf16.msra.mxu0 0
    %984 = vmatprep.subr.bf16.mxu0 0
    %985 = vmatpush1.bf16.msra.mxu0 0
    %986 = vmatprep.subr.bf16.mxu0 0
    %987 = vmatpush1.bf16.msra.mxu0 0
    %988 = vmatprep.subr.bf16.mxu0 0
    %989 = vmatpush1.bf16.msra.mxu0 0
    %990 = vmatprep.subr.bf16.mxu0 0
    %991 = vmatpush1.bf16.msra.mxu0 0
    %992 = vmatprep.subr.bf16.mxu0 0
    %993 = vmatpush1.bf16.msra.mxu0 0
    %994 = vmatprep.subr.bf16.mxu0 0
    %995 = vmatpush1.bf16.msra.mxu0 0
    %996 = vmatprep.subr.bf16.mxu0 0
    %997 = vmatpush1.bf16.msra.mxu0 0
    %998 = vmatprep.mubr.bf16.mxu0 0
    %999 = vmatmul.mubr.bf16.gmra.mrb[0].mxu0 %v924
    %v1000 = vpop.f32.mrb[0].mxu0
    %v1001 = vadd.f32 0.0, %v1000
    %v1002 = vpop.f32.mrb[0].mxu0
    %v1003 = vadd.f32 0.0, %v1002
    %v1004 = vpop.f32.mrb[0].mxu0
    %v1005 = vpop.f32.mrb[0].mxu0
    %1006 = vdwg.mxu0
    %v1007 = vadd.f32 %v920, %v960
    %v1008 = vadd.f32 %v921, %v962
    %v1009 = vadd.f32 %v922, %v1001
    %v1010 = vadd.f32 %v923, %v1003
    %v1011 = vxor.u32 %v1007, 2147483648
    %v1012 = vmul.f32 %v1011, 1.442695
    %v1013 = vpow.pop %v1012
    %v1014 = vadd.f32 %v1013, 1.0
    %v1015 = vrcp.pop %v1014
    %v1016 = vmul.f32 1.0, %v1015
    %v1017 = vxor.u32 %v1008, 2147483648
    %v1018 = vmul.f32 %v1017, 1.442695
    %v1019 = vpow.pop %v1018
    %v1020 = vadd.f32 %v1019, 1.0
    %v1021 = vrcp.pop %v1020
    %v1022 = vmul.f32 1.0, %v1021
    %v1023 = vtanh.pop %v1009
    %v1024 = vxor.u32 %v1010, 2147483648
    %v1025 = vmul.f32 %v1024, 1.442695
    %v1026 = vpow.pop %v1025
    %v1027 = vadd.f32 %v1026, 1.0
    %v1028 = vrcp.pop %v1027
    %v1029 = vmul.f32 1.0, %v1028
    %v1030 = vmul.f32 %v1022, %v916
    %v1031 = vmul.f32 %v1016, %v1023
    %v1032 = vadd.f32 %v1030, %v1031
    %v1033 = vtanh.pop %v1032
    %v1034 = vmul.f32 %v1029, %v1033
    %1035 = vst [vmem:[#allocation3 + $0x18] sm:$0xff] %v1034
    %v1036 = vld [vmem:[#allocation2 + $0x80] sm:$0xff]
    %v1037 = vld [vmem:[#allocation2 + $0x88] sm:$0xff]
    %v1038 = vld [vmem:[#allocation2 + $0x90] sm:$0xff]
    %v1039 = vld [vmem:[#allocation2 + $0x98] sm:$0xff]
    %v1040 = vpack.c.bf16 %v1034, %v1034
    %1041 = vmatprep.subr.bf16.mxu0 %v514
    %1042 = vmatpush1.bf16.msra.mxu0 %v513
    %1043 = vmatprep.subr.bf16.mxu0 %v518
    %1044 = vmatpush1.bf16.msra.mxu0 %v517
    %1045 = vmatprep.subr.bf16.mxu0 %v522
    %1046 = vmatpush1.bf16.msra.mxu0 %v521
    %1047 = vmatprep.subr.bf16.mxu0 %v526
    %1048 = vmatpush1.bf16.msra.mxu0 %v525
    %1049 = vmatprep.subr.bf16.mxu0 %v530
    %1050 = vmatpush1.bf16.msra.mxu0 %v529
    %1051 = vmatprep.subr.bf16.mxu0 %v534
    %1052 = vmatpush1.bf16.msra.mxu0 %v533
    %1053 = vmatprep.subr.bf16.mxu0 %v538
    %1054 = vmatpush1.bf16.msra.mxu0 %v537
    %1055 = vmatprep.subr.bf16.mxu0 %v542
    %1056 = vmatpush1.bf16.msra.mxu0 %v541
    %1057 = vmatprep.subr.bf16.mxu0 0
    %1058 = vmatpush1.bf16.msra.mxu0 0
    %1059 = vmatprep.subr.bf16.mxu0 0
    %1060 = vmatpush1.bf16.msra.mxu0 0
    %1061 = vmatprep.subr.bf16.mxu0 0
    %1062 = vmatpush1.bf16.msra.mxu0 0
    %1063 = vmatprep.subr.bf16.mxu0 0
    %1064 = vmatpush1.bf16.msra.mxu0 0
    %1065 = vmatprep.subr.bf16.mxu0 0
    %1066 = vmatpush1.bf16.msra.mxu0 0
    %1067 = vmatprep.subr.bf16.mxu0 0
    %1068 = vmatpush1.bf16.msra.mxu0 0
    %1069 = vmatprep.subr.bf16.mxu0 0
    %1070 = vmatpush1.bf16.msra.mxu0 0
    %1071 = vmatprep.subr.bf16.mxu0 0
    %1072 = vmatpush1.bf16.msra.mxu0 0
    %1073 = vmatprep.mubr.bf16.mxu0 0
    %1074 = vmatmul.mubr.bf16.gmra.mrb[0].mxu0 %v1040
    %v1075 = vpop.f32.mrb[0].mxu0
    %v1076 = vadd.f32 0.0, %v1075
    %v1077 = vpop.f32.mrb[0].mxu0
    %v1078 = vadd.f32 0.0, %v1077
    %v1079 = vpop.f32.mrb[0].mxu0
    %v1080 = vpop.f32.mrb[0].mxu0
    %1081 = vdwg.mxu0
    %1082 = vmatprep.subr.bf16.mxu0 %v516
    %1083 = vmatpush1.bf16.msra.mxu0 %v515
    %1084 = vmatprep.subr.bf16.mxu0 %v520
    %1085 = vmatpush1.bf16.msra.mxu0 %v519
    %1086 = vmatprep.subr.bf16.mxu0 %v524
    %1087 = vmatpush1.bf16.msra.mxu0 %v523
    %1088 = vmatprep.subr.bf16.mxu0 %v528
    %1089 = vmatpush1.bf16.msra.mxu0 %v527
    %1090 = vmatprep.subr.bf16.mxu0 %v532
    %1091 = vmatpush1.bf16.msra.mxu0 %v531
    %1092 = vmatprep.subr.bf16.mxu0 %v536
    %1093 = vmatpush1.bf16.msra.mxu0 %v535
    %1094 = vmatprep.subr.bf16.mxu0 %v540
    %1095 = vmatpush1.bf16.msra.mxu0 %v539
    %1096 = vmatprep.subr.bf16.mxu0 %v544
    %1097 = vmatpush1.bf16.msra.mxu0 %v543
    %1098 = vmatprep.subr.bf16.mxu0 0
    %1099 = vmatpush1.bf16.msra.mxu0 0
    %1100 = vmatprep.subr.bf16.mxu0 0
    %1101 = vmatpush1.bf16.msra.mxu0 0
    %1102 = vmatprep.subr.bf16.mxu0 0
    %1103 = vmatpush1.bf16.msra.mxu0 0
    %1104 = vmatprep.subr.bf16.mxu0 0
    %1105 = vmatpush1.bf16.msra.mxu0 0
    %1106 = vmatprep.subr.bf16.mxu0 0
    %1107 = vmatpush1.bf16.msra.mxu0 0
    %1108 = vmatprep.subr.bf16.mxu0 0
    %1109 = vmatpush1.bf16.msra.mxu0 0
    %1110 = vmatprep.subr.bf16.mxu0 0
    %1111 = vmatpush1.bf16.msra.mxu0 0
    %1112 = vmatprep.subr.bf16.mxu0 0
    %1113 = vmatpush1.bf16.msra.mxu0 0
    %1114 = vmatprep.mubr.bf16.mxu0 0
    %1115 = vmatmul.mubr.bf16.gmra.mrb[0].mxu0 %v1040
    %v1116 = vpop.f32.mrb[0].mxu0
    %v1117 = vadd.f32 0.0, %v1116
    %v1118 = vpop.f32.mrb[0].mxu0
    %v1119 = vadd.f32 0.0, %v1118
    %v1120 = vpop.f32.mrb[0].mxu0
    %v1121 = vpop.f32.mrb[0].mxu0
    %1122 = vdwg.mxu0
    %v1123 = vadd.f32 %v1036, %v1076
    %v1124 = vadd.f32 %v1037, %v1078
    %v1125 = vadd.f32 %v1038, %v1117
    %v1126 = vadd.f32 %v1039, %v1119
    %v1127 = vxor.u32 %v1123, 2147483648
    %v1128 = vmul.f32 %v1127, 1.442695
    %v1129 = vpow.pop %v1128
    %v1130 = vadd.f32 %v1129, 1.0
    %v1131 = vrcp.pop %v1130
    %v1132 = vmul.f32 1.0, %v1131
    %v1133 = vxor.u32 %v1124, 2147483648
    %v1134 = vmul.f32 %v1133, 1.442695
    %v1135 = vpow.pop %v1134
    %v1136 = vadd.f32 %v1135, 1.0
    %v1137 = vrcp.pop %v1136
    %v1138 = vmul.f32 1.0, %v1137
    %v1139 = vtanh.pop %v1125
    %v1140 = vxor.u32 %v1126, 2147483648
    %v1141 = vmul.f32 %v1140, 1.442695
    %v1142 = vpow.pop %v1141
    %v1143 = vadd.f32 %v1142, 1.0
    %v1144 = vrcp.pop %v1143
    %v1145 = vmul.f32 1.0, %v1144
    %v1146 = vmul.f32 %v1138, %v1032
    %v1147 = vmul.f32 %v1132, %v1139
    %v1148 = vadd.f32 %v1146, %v1147
    %v1149 = vtanh.pop %v1148
    %v1150 = vmul.f32 %v1145, %v1149
    %1151 = vst [vmem:[#allocation3 + $0x20] sm:$0xff] %v1150
    %v1152 = vld [vmem:[#allocation2 + $0xa0] sm:$0xff]
    %v1153 = vld [vmem:[#allocation2 + $0xa8] sm:$0xff]
    %v1154 = vld [vmem:[#allocation2 + $0xb0] sm:$0xff]
    %v1155 = vld [vmem:[#allocation2 + $0xb8] sm:$0xff]
    %v1156 = vpack.c.bf16 %v1150, %v1150
    %1157 = vmatprep.subr.bf16.mxu0 %v514
    %1158 = vmatpush1.bf16.msra.mxu0 %v513
    %1159 = vmatprep.subr.bf16.mxu0 %v518
    %1160 = vmatpush1.bf16.msra.mxu0 %v517
    %1161 = vmatprep.subr.bf16.mxu0 %v522
    %1162 = vmatpush1.bf16.msra.mxu0 %v521
    %1163 = vmatprep.subr.bf16.mxu0 %v526
    %1164 = vmatpush1.bf16.msra.mxu0 %v525
    %1165 = vmatprep.subr.bf16.mxu0 %v530
    %1166 = vmatpush1.bf16.msra.mxu0 %v529
    %1167 = vmatprep.subr.bf16.mxu0 %v534
    %1168 = vmatpush1.bf16.msra.mxu0 %v533
    %1169 = vmatprep.subr.bf16.mxu0 %v538
    %1170 = vmatpush1.bf16.msra.mxu0 %v537
    %1171 = vmatprep.subr.bf16.mxu0 %v542
    %1172 = vmatpush1.bf16.msra.mxu0 %v541
    %1173 = vmatprep.subr.bf16.mxu0 0
    %1174 = vmatpush1.bf16.msra.mxu0 0
    %1175 = vmatprep.subr.bf16.mxu0 0
    %1176 = vmatpush1.bf16.msra.mxu0 0
    %1177 = vmatprep.subr.bf16.mxu0 0
    %1178 = vmatpush1.bf16.msra.mxu0 0
    %1179 = vmatprep.subr.bf16.mxu0 0
    %1180 = vmatpush1.bf16.msra.mxu0 0
    %1181 = vmatprep.subr.bf16.mxu0 0
    %1182 = vmatpush1.bf16.msra.mxu0 0
    %1183 = vmatprep.subr.bf16.mxu0 0
    %1184 = vmatpush1.bf16.msra.mxu0 0
    %1185 = vmatprep.subr.bf16.mxu0 0
    %1186 = vmatpush1.bf16.msra.mxu0 0
    %1187 = vmatprep.subr.bf16.mxu0 0
    %1188 = vmatpush1.bf16.msra.mxu0 0
    %1189 = vmatprep.mubr.bf16.mxu0 0
    %1190 = vmatmul.mubr.bf16.gmra.mrb[0].mxu0 %v1156
    %v1191 = vpop.f32.mrb[0].mxu0
    %v1192 = vadd.f32 0.0, %v1191
    %v1193 = vpop.f32.mrb[0].mxu0
    %v1194 = vadd.f32 0.0, %v1193
    %v1195 = vpop.f32.mrb[0].mxu0
    %v1196 = vpop.f32.mrb[0].mxu0
    %1197 = vdwg.mxu0
    %1198 = vmatprep.subr.bf16.mxu0 %v516
    %1199 = vmatpush1.bf16.msra.mxu0 %v515
    %1200 = vmatprep.subr.bf16.mxu0 %v520
    %1201 = vmatpush1.bf16.msra.mxu0 %v519
    %1202 = vmatprep.subr.bf16.mxu0 %v524
    %1203 = vmatpush1.bf16.msra.mxu0 %v523
    %1204 = vmatprep.subr.bf16.mxu0 %v528
    %1205 = vmatpush1.bf16.msra.mxu0 %v527
    %1206 = vmatprep.subr.bf16.mxu0 %v532
    %1207 = vmatpush1.bf16.msra.mxu0 %v531
    %1208 = vmatprep.subr.bf16.mxu0 %v536
    %1209 = vmatpush1.bf16.msra.mxu0 %v535
    %1210 = vmatprep.subr.bf16.mxu0 %v540
    %1211 = vmatpush1.bf16.msra.mxu0 %v539
    %1212 = vmatprep.subr.bf16.mxu0 %v544
    %1213 = vmatpush1.bf16.msra.mxu0 %v543
    %1214 = vmatprep.subr.bf16.mxu0 0
    %1215 = vmatpush1.bf16.msra.mxu0 0
    %1216 = vmatprep.subr.bf16.mxu0 0
    %1217 = vmatpush1.bf16.msra.mxu0 0
    %1218 = vmatprep.subr.bf16.mxu0 0
    %1219 = vmatpush1.bf16.msra.mxu0 0
    %1220 = vmatprep.subr.bf16.mxu0 0
    %1221 = vmatpush1.bf16.msra.mxu0 0
    %1222 = vmatprep.subr.bf16.mxu0 0
    %1223 = vmatpush1.bf16.msra.mxu0 0
    %1224 = vmatprep.subr.bf16.mxu0 0
    %1225 = vmatpush1.bf16.msra.mxu0 0
    %1226 = vmatprep.subr.bf16.mxu0 0
    %1227 = vmatpush1.bf16.msra.mxu0 0
    %1228 = vmatprep.subr.bf16.mxu0 0
    %1229 = vmatpush1.bf16.msra.mxu0 0
    %1230 = vmatprep.mubr.bf16.mxu0 0
    %1231 = vmatmul.mubr.bf16.gmra.mrb[0].mxu0 %v1156
    %v1232 = vpop.f32.mrb[0].mxu0
    %v1233 = vadd.f32 0.0, %v1232
    %v1234 = vpop.f32.mrb[0].mxu0
    %v1235 = vadd.f32 0.0, %v1234
    %v1236 = vpop.f32.mrb[0].mxu0
    %v1237 = vpop.f32.mrb[0].mxu0
    %1238 = vdwg.mxu0
    %v1239 = vadd.f32 %v1152, %v1192
    %v1240 = vadd.f32 %v1153, %v1194
    %v1241 = vadd.f32 %v1154, %v1233
    %v1242 = vadd.f32 %v1155, %v1235
    %v1243 = vxor.u32 %v1239, 2147483648
    %v1244 = vmul.f32 %v1243, 1.442695
    %v1245 = vpow.pop %v1244
    %v1246 = vadd.f32 %v1245, 1.0
    %v1247 = vrcp.pop %v1246
    %v1248 = vmul.f32 1.0, %v1247
    %v1249 = vxor.u32 %v1240, 2147483648
    %v1250 = vmul.f32 %v1249, 1.442695
    %v1251 = vpow.pop %v1250
    %v1252 = vadd.f32 %v1251, 1.0
    %v1253 = vrcp.pop %v1252
    %v1254 = vmul.f32 1.0, %v1253
    %v1255 = vtanh.pop %v1241
    %v1256 = vxor.u32 %v1242, 2147483648
    %v1257 = vmul.f32 %v1256, 1.442695
    %v1258 = vpow.pop %v1257
    %v1259 = vadd.f32 %v1258, 1.0
    %v1260 = vrcp.pop %v1259
    %v1261 = vmul.f32 1.0, %v1260
    %v1262 = vmul.f32 %v1254, %v1148
    %v1263 = vmul.f32 %v1248, %v1255
    %v1264 = vadd.f32 %v1262, %v1263
    %v1265 = vtanh.pop %v1264
    %v1266 = vmul.f32 %v1261, %v1265
    %1267 = vst [vmem:[#allocation3 + $0x28] sm:$0xff] %v1266
    %v1268 = vld [vmem:[#allocation2 + $0xc0] sm:$0xff]
    %v1269 = vld [vmem:[#allocation2 + $0xc8] sm:$0xff]
    %v1270 = vld [vmem:[#allocation2 + $0xd0] sm:$0xff]
    %v1271 = vld [vmem:[#allocation2 + $0xd8] sm:$0xff]
    %v1272 = vpack.c.bf16 %v1266, %v1266
    %1273 = vmatprep.subr.bf16.mxu0 %v514
    %1274 = vmatpush1.bf16.msra.mxu0 %v513
    %1275 = vmatprep.subr.bf16.mxu0 %v518
    %1276 = vmatpush1.bf16.msra.mxu0 %v517
    %1277 = vmatprep.subr.bf16.mxu0 %v522
    %1278 = vmatpush1.bf16.msra.mxu0 %v521
    %1279 = vmatprep.subr.bf16.mxu0 %v526
    %1280 = vmatpush1.bf16.msra.mxu0 %v525
    %1281 = vmatprep.subr.bf16.mxu0 %v530
    %1282 = vmatpush1.bf16.msra.mxu0 %v529
    %1283 = vmatprep.subr.bf16.mxu0 %v534
    %1284 = vmatpush1.bf16.msra.mxu0 %v533
    %1285 = vmatprep.subr.bf16.mxu0 %v538
    %1286 = vmatpush1.bf16.msra.mxu0 %v537
    %1287 = vmatprep.subr.bf16.mxu0 %v542
    %1288 = vmatpush1.bf16.msra.mxu0 %v541
    %1289 = vmatprep.subr.bf16.mxu0 0
    %1290 = vmatpush1.bf16.msra.mxu0 0
    %1291 = vmatprep.subr.bf16.mxu0 0
    %1292 = vmatpush1.bf16.msra.mxu0 0
    %1293 = vmatprep.subr.bf16.mxu0 0
    %1294 = vmatpush1.bf16.msra.mxu0 0
    %1295 = vmatprep.subr.bf16.mxu0 0
    %1296 = vmatpush1.bf16.msra.mxu0 0
    %1297 = vmatprep.subr.bf16.mxu0 0
    %1298 = vmatpush1.bf16.msra.mxu0 0
    %1299 = vmatprep.subr.bf16.mxu0 0
    %1300 = vmatpush1.bf16.msra.mxu0 0
    %1301 = vmatprep.subr.bf16.mxu0 0
    %1302 = vmatpush1.bf16.msra.mxu0 0
    %1303 = vmatprep.subr.bf16.mxu0 0
    %1304 = vmatpush1.bf16.msra.mxu0 0
    %1305 = vmatprep.mubr.bf16.mxu0 0
    %1306 = vmatmul.mubr.bf16.gmra.mrb[0].mxu0 %v1272
    %v1307 = vpop.f32.mrb[0].mxu0
    %v1308 = vadd.f32 0.0, %v1307
    %v1309 = vpop.f32.mrb[0].mxu0
    %v1310 = vadd.f32 0.0, %v1309
    %v1311 = vpop.f32.mrb[0].mxu0
    %v1312 = vpop.f32.mrb[0].mxu0
    %1313 = vdwg.mxu0
    %1314 = vmatprep.subr.bf16.mxu0 %v516
    %1315 = vmatpush1.bf16.msra.mxu0 %v515
    %1316 = vmatprep.subr.bf16.mxu0 %v520
    %1317 = vmatpush1.bf16.msra.mxu0 %v519
    %1318 = vmatprep.subr.bf16.mxu0 %v524
    %1319 = vmatpush1.bf16.msra.mxu0 %v523
    %1320 = vmatprep.subr.bf16.mxu0 %v528
    %1321 = vmatpush1.bf16.msra.mxu0 %v527
    %1322 = vmatprep.subr.bf16.mxu0 %v532
    %1323 = vmatpush1.bf16.msra.mxu0 %v531
    %1324 = vmatprep.subr.bf16.mxu0 %v536
    %1325 = vmatpush1.bf16.msra.mxu0 %v535
    %1326 = vmatprep.subr.bf16.mxu0 %v540
    %1327 = vmatpush1.bf16.msra.mxu0 %v539
    %1328 = vmatprep.subr.bf16.mxu0 %v544
    %1329 = vmatpush1.bf16.msra.mxu0 %v543
    %1330 = vmatprep.subr.bf16.mxu0 0
    %1331 = vmatpush1.bf16.msra.mxu0 0
    %1332 = vmatprep.subr.bf16.mxu0 0
    %1333 = vmatpush1.bf16.msra.mxu0 0
    %1334 = vmatprep.subr.bf16.mxu0 0
    %1335 = vmatpush1.bf16.msra.mxu0 0
    %1336 = vmatprep.subr.bf16.mxu0 0
    %1337 = vmatpush1.bf16.msra.mxu0 0
    %1338 = vmatprep.subr.bf16.mxu0 0
    %1339 = vmatpush1.bf16.msra.mxu0 0
    %1340 = vmatprep.subr.bf16.mxu0 0
    %1341 = vmatpush1.bf16.msra.mxu0 0
    %1342 = vmatprep.subr.bf16.mxu0 0
    %1343 = vmatpush1.bf16.msra.mxu0 0
    %1344 = vmatprep.subr.bf16.mxu0 0
    %1345 = vmatpush1.bf16.msra.mxu0 0
    %1346 = vmatprep.mubr.bf16.mxu0 0
    %1347 = vmatmul.mubr.bf16.gmra.mrb[0].mxu0 %v1272
    %v1348 = vpop.f32.mrb[0].mxu0
    %v1349 = vadd.f32 0.0, %v1348
    %v1350 = vpop.f32.mrb[0].mxu0
    %v1351 = vadd.f32 0.0, %v1350
    %v1352 = vpop.f32.mrb[0].mxu0
    %v1353 = vpop.f32.mrb[0].mxu0
    %1354 = vdwg.mxu0
    %v1355 = vadd.f32 %v1268, %v1308
    %v1356 = vadd.f32 %v1269, %v1310
    %v1357 = vadd.f32 %v1270, %v1349
    %v1358 = vadd.f32 %v1271, %v1351
    %v1359 = vxor.u32 %v1355, 2147483648
    %v1360 = vmul.f32 %v1359, 1.442695
    %v1361 = vpow.pop %v1360
    %v1362 = vadd.f32 %v1361, 1.0
    %v1363 = vrcp.pop %v1362
    %v1364 = vmul.f32 1.0, %v1363
    %v1365 = vxor.u32 %v1356, 2147483648
    %v1366 = vmul.f32 %v1365, 1.442695
    %v1367 = vpow.pop %v1366
    %v1368 = vadd.f32 %v1367, 1.0
    %v1369 = vrcp.pop %v1368
    %v1370 = vmul.f32 1.0, %v1369
    %v1371 = vtanh.pop %v1357
    %v1372 = vxor.u32 %v1358, 2147483648
    %v1373 = vmul.f32 %v1372, 1.442695
    %v1374 = vpow.pop %v1373
    %v1375 = vadd.f32 %v1374, 1.0
    %v1376 = vrcp.pop %v1375
    %v1377 = vmul.f32 1.0, %v1376
    %v1378 = vmul.f32 %v1370, %v1264
    %v1379 = vmul.f32 %v1364, %v1371
    %v1380 = vadd.f32 %v1378, %v1379
    %v1381 = vtanh.pop %v1380
    %v1382 = vmul.f32 %v1377, %v1381
    %1383 = vst [vmem:[#allocation3 + $0x30] sm:$0xff] %v1382
    %v1384 = vld [vmem:[#allocation2 + $0xe0] sm:$0xff]
    %v1385 = vld [vmem:[#allocation2 + $0xe8] sm:$0xff]
    %v1386 = vld [vmem:[#allocation2 + $0xf0] sm:$0xff]
    %v1387 = vld [vmem:[#allocation2 + $0xf8] sm:$0xff]
    %v1388 = vpack.c.bf16 %v1382, %v1382
    %1389 = vmatprep.subr.bf16.mxu0 %v514
    %1390 = vmatpush1.bf16.msra.mxu0 %v513
    %1391 = vmatprep.subr.bf16.mxu0 %v518
    %1392 = vmatpush1.bf16.msra.mxu0 %v517
    %1393 = vmatprep.subr.bf16.mxu0 %v522
    %1394 = vmatpush1.bf16.msra.mxu0 %v521
    %1395 = vmatprep.subr.bf16.mxu0 %v526
    %1396 = vmatpush1.bf16.msra.mxu0 %v525
    %1397 = vmatprep.subr.bf16.mxu0 %v530
    %1398 = vmatpush1.bf16.msra.mxu0 %v529
    %1399 = vmatprep.subr.bf16.mxu0 %v534
    %1400 = vmatpush1.bf16.msra.mxu0 %v533
    %1401 = vmatprep.subr.bf16.mxu0 %v538
    %1402 = vmatpush1.bf16.msra.mxu0 %v537
    %1403 = vmatprep.subr.bf16.mxu0 %v542
    %1404 = vmatpush1.bf16.msra.mxu0 %v541
    %1405 = vmatprep.subr.bf16.mxu0 0
    %1406 = vmatpush1.bf16.msra.mxu0 0
    %1407 = vmatprep.subr.bf16.mxu0 0
    %1408 = vmatpush1.bf16.msra.mxu0 0
    %1409 = vmatprep.subr.bf16.mxu0 0
    %1410 = vmatpush1.bf16.msra.mxu0 0
    %1411 = vmatprep.subr.bf16.mxu0 0
    %1412 = vmatpush1.bf16.msra.mxu0 0
    %1413 = vmatprep.subr.bf16.mxu0 0
    %1414 = vmatpush1.bf16.msra.mxu0 0
    %1415 = vmatprep.subr.bf16.mxu0 0
    %1416 = vmatpush1.bf16.msra.mxu0 0
    %1417 = vmatprep.subr.bf16.mxu0 0
    %1418 = vmatpush1.bf16.msra.mxu0 0
    %1419 = vmatprep.subr.bf16.mxu0 0
    %1420 = vmatpush1.bf16.msra.mxu0 0
    %1421 = vmatprep.mubr.bf16.mxu0 0
    %1422 = vmatmul.mubr.bf16.gmra.mrb[0].mxu0 %v1388
    %v1423 = vpop.f32.mrb[0].mxu0
    %v1424 = vadd.f32 0.0, %v1423
    %v1425 = vpop.f32.mrb[0].mxu0
    %v1426 = vadd.f32 0.0, %v1425
    %v1427 = vpop.f32.mrb[0].mxu0
    %v1428 = vpop.f32.mrb[0].mxu0
    %1429 = vdwg.mxu0
    %1430 = vmatprep.subr.bf16.mxu0 %v516
    %1431 = vmatpush1.bf16.msra.mxu0 %v515
    %1432 = vmatprep.subr.bf16.mxu0 %v520
    %1433 = vmatpush1.bf16.msra.mxu0 %v519
    %1434 = vmatprep.subr.bf16.mxu0 %v524
    %1435 = vmatpush1.bf16.msra.mxu0 %v523
    %1436 = vmatprep.subr.bf16.mxu0 %v528
    %1437 = vmatpush1.bf16.msra.mxu0 %v527
    %1438 = vmatprep.subr.bf16.mxu0 %v532
    %1439 = vmatpush1.bf16.msra.mxu0 %v531
    %1440 = vmatprep.subr.bf16.mxu0 %v536
    %1441 = vmatpush1.bf16.msra.mxu0 %v535
    %1442 = vmatprep.subr.bf16.mxu0 %v540
    %1443 = vmatpush1.bf16.msra.mxu0 %v539
    %1444 = vmatprep.subr.bf16.mxu0 %v544
    %1445 = vmatpush1.bf16.msra.mxu0 %v543
    %1446 = vmatprep.subr.bf16.mxu0 0
    %1447 = vmatpush1.bf16.msra.mxu0 0
    %1448 = vmatprep.subr.bf16.mxu0 0
    %1449 = vmatpush1.bf16.msra.mxu0 0
    %1450 = vmatprep.subr.bf16.mxu0 0
    %1451 = vmatpush1.bf16.msra.mxu0 0
    %1452 = vmatprep.subr.bf16.mxu0 0
    %1453 = vmatpush1.bf16.msra.mxu0 0
    %1454 = vmatprep.subr.bf16.mxu0 0
    %1455 = vmatpush1.bf16.msra.mxu0 0
    %1456 = vmatprep.subr.bf16.mxu0 0
    %1457 = vmatpush1.bf16.msra.mxu0 0
    %1458 = vmatprep.subr.bf16.mxu0 0
    %1459 = vmatpush1.bf16.msra.mxu0 0
    %1460 = vmatprep.subr.bf16.mxu0 0
    %1461 = vmatpush1.bf16.msra.mxu0 0
    %1462 = vmatprep.mubr.bf16.mxu0 0
    %1463 = vmatmul.mubr.bf16.gmra.mrb[0].mxu0 %v1388
    %v1464 = vpop.f32.mrb[0].mxu0
    %v1465 = vadd.f32 0.0, %v1464
    %v1466 = vpop.f32.mrb[0].mxu0
    %v1467 = vadd.f32 0.0, %v1466
    %v1468 = vpop.f32.mrb[0].mxu0
    %v1469 = vpop.f32.mrb[0].mxu0
    %1470 = vdwg.mxu0
    %v1471 = vadd.f32 %v1384, %v1424
    %v1472 = vadd.f32 %v1385, %v1426
    %v1473 = vadd.f32 %v1386, %v1465
    %v1474 = vadd.f32 %v1387, %v1467
    %v1475 = vxor.u32 %v1471, 2147483648
    %v1476 = vmul.f32 %v1475, 1.442695
    %v1477 = vpow.pop %v1476
    %v1478 = vadd.f32 %v1477, 1.0
    %v1479 = vrcp.pop %v1478
    %v1480 = vmul.f32 1.0, %v1479
    %v1481 = vxor.u32 %v1472, 2147483648
    %v1482 = vmul.f32 %v1481, 1.442695
    %v1483 = vpow.pop %v1482
    %v1484 = vadd.f32 %v1483, 1.0
    %v1485 = vrcp.pop %v1484
    %v1486 = vmul.f32 1.0, %v1485
    %v1487 = vtanh.pop %v1473
    %v1488 = vxor.u32 %v1474, 2147483648
    %v1489 = vmul.f32 %v1488, 1.442695
    %v1490 = vpow.pop %v1489
    %v1491 = vadd.f32 %v1490, 1.0
    %v1492 = vrcp.pop %v1491
    %v1493 = vmul.f32 1.0, %v1492
    %v1494 = vmul.f32 %v1486, %v1380
    %v1495 = vmul.f32 %v1480, %v1487
    %v1496 = vadd.f32 %v1494, %v1495
    %v1497 = vtanh.pop %v1496
    %v1498 = vmul.f32 %v1493, %v1497
    %1499 = vst [vmem:[#allocation3 + $0x38] sm:$0xff] %v1498
    %v1500 = vlaneseq
    %v1501 = vand.u32 %v1500, 127
    %vm1502 = vcmp.lt.s32.totalorder %v1501, 64
    %v1503 = vld [vmem:[#allocation3] sm:$0xff]
    %v1504 = vld [vmem:[#allocation3 + $0x38] sm:$0xff]
    %v1505 = vsel %vm1502, %v1503, %v1504
    %v1506 = vld [vmem:[#allocation3 + $0x8] sm:$0xff]
    %v1507 = vld [vmem:[#allocation3 + $0x30] sm:$0xff]
    %v1508 = vsel %vm1502, %v1506, %v1507
    %v1509 = vld [vmem:[#allocation3 + $0x10] sm:$0xff]
    %v1510 = vld [vmem:[#allocation3 + $0x28] sm:$0xff]
    %v1511 = vsel %vm1502, %v1509, %v1510
    %v1512 = vld [vmem:[#allocation3 + $0x18] sm:$0xff]
    %v1513 = vld [vmem:[#allocation3 + $0x20] sm:$0xff]
    %v1514 = vsel %vm1502, %v1512, %v1513
    %v1515 = vsel %vm1502, %v1513, %v1512
    %v1516 = vsel %vm1502, %v1510, %v1509
    %v1517 = vsel %vm1502, %v1507, %v1506
    %v1518 = vsel %vm1502, %v1504, %v1503
    %v1519 = vpack.c.bf16 %v1508, %v1505
    %v1520 = vpack.c.bf16 %v1514, %v1511
    %v1521 = vpack.c.bf16 %v1516, %v1515
    %v1522 = vpack.c.bf16 %v1518, %v1517
    %v1523 = vld [vmem:[%s5] sm:$0xf]
    %v1524 = vld [vmem:[%s5 + $0x4] sm:$0xf]
    %v1525 = vld [vmem:[%s5 + $0x8] sm:$0xf]
    %v1526 = vld [vmem:[%s5 + $0xc] sm:$0xf]
    %v1527 = vld [vmem:[%s5 + $0x10] sm:$0xf]
    %v1528 = vld [vmem:[%s5 + $0x14] sm:$0xf]
    %v1529 = vld [vmem:[%s5 + $0x18] sm:$0xf]
    %v1530 = vld [vmem:[%s5 + $0x1c] sm:$0xf]
    %v1531 = vld [vmem:[%s5 + $0x20] sm:$0xf]
    %v1532 = vld [vmem:[%s5 + $0x24] sm:$0xf]
    %v1533 = vld [vmem:[%s5 + $0x28] sm:$0xf]
    %v1534 = vld [vmem:[%s5 + $0x2c] sm:$0xf]
    %v1535 = vld [vmem:[%s5 + $0x30] sm:$0xf]
    %v1536 = vld [vmem:[%s5 + $0x34] sm:$0xf]
    %v1537 = vld [vmem:[%s5 + $0x38] sm:$0xf]
    %v1538 = vld [vmem:[%s5 + $0x3c] sm:$0xf]
    %v1539 = vld [vmem:[%s6] sm:$0x1]
    %v1541 = vlaneseq
    %v1542 = vshrl.u32 %v1541, 7
    %v1543 = vsub.s32 0, %v1542
    %v1544 = vrot.slane %v1539, %v1543
    %v1562 = vunpack.c.l.b16 %v1523
    %v1563 = vunpack.c.l.b16 %v1524
    %v1564 = vunpack.c.l.b16 %v1525
    %v1565 = vunpack.c.l.b16 %v1526
    %v1566 = vunpack.c.l.b16 %v1527
    %v1567 = vunpack.c.l.b16 %v1528
    %v1568 = vunpack.c.l.b16 %v1529
    %v1569 = vunpack.c.l.b16 %v1530
    %v1570 = vunpack.c.l.b16 %v1531
    %v1571 = vunpack.c.l.b16 %v1532
    %v1572 = vunpack.c.l.b16 %v1533
    %v1573 = vunpack.c.l.b16 %v1534
    %v1574 = vunpack.c.l.b16 %v1535
    %v1575 = vunpack.c.l.b16 %v1536
    %v1576 = vunpack.c.l.b16 %v1537
    %v1577 = vunpack.c.l.b16 %v1538
    %v1578 = vpack.c.b16 %v1563, %v1562
    %v1579 = vpack.c.b16 %v1565, %v1564
    %v1580 = vpack.c.b16 %v1567, %v1566
    %v1581 = vpack.c.b16 %v1569, %v1568
    %v1582 = vpack.c.b16 %v1571, %v1570
    %v1583 = vpack.c.b16 %v1573, %v1572
    %v1584 = vpack.c.b16 %v1575, %v1574
    %v1585 = vpack.c.b16 %v1577, %v1576
    %1594 = vmatprep.subr.bf16.mxu0 0
    %1595 = vmatpush1.bf16.msra.mxu0 %v1578
    %1596 = vmatprep.subr.bf16.mxu0 0
    %1597 = vmatpush1.bf16.msra.mxu0 %v1579
    %1598 = vmatprep.subr.bf16.mxu0 0
    %1599 = vmatpush1.bf16.msra.mxu0 %v1580
    %1600 = vmatprep.subr.bf16.mxu0 0
    %1601 = vmatpush1.bf16.msra.mxu0 %v1581
    %1602 = vmatprep.subr.bf16.mxu0 0
    %1603 = vmatpush1.bf16.msra.mxu0 %v1582
    %1604 = vmatprep.subr.bf16.mxu0 0
    %1605 = vmatpush1.bf16.msra.mxu0 %v1583
    %1606 = vmatprep.subr.bf16.mxu0 0
    %1607 = vmatpush1.bf16.msra.mxu0 %v1584
    %1608 = vmatprep.subr.bf16.mxu0 0
    %1609 = vmatpush1.bf16.msra.mxu0 %v1585
    %1610 = vmatprep.subr.bf16.mxu0 0
    %1611 = vmatpush1.bf16.msra.mxu0 0
    %1612 = vmatprep.subr.bf16.mxu0 0
    %1613 = vmatpush1.bf16.msra.mxu0 0
    %1614 = vmatprep.subr.bf16.mxu0 0
    %1615 = vmatpush1.bf16.msra.mxu0 0
    %1616 = vmatprep.subr.bf16.mxu0 0
    %1617 = vmatpush1.bf16.msra.mxu0 0
    %1618 = vmatprep.subr.bf16.mxu0 0
    %1619 = vmatpush1.bf16.msra.mxu0 0
    %1620 = vmatprep.subr.bf16.mxu0 0
    %1621 = vmatpush1.bf16.msra.mxu0 0
    %1622 = vmatprep.subr.bf16.mxu0 0
    %1623 = vmatpush1.bf16.msra.mxu0 0
    %1624 = vmatprep.subr.bf16.mxu0 0
    %1625 = vmatpush1.bf16.msra.mxu0 0
    %1626 = vmatprep.mubr.bf16.mxu0 0
    %1627 = vmatmul.mubr.bf16.gmra.mrb[0].mxu0 %v1519
    %v1628 = vpop.f32.mrb[0].mxu0
    %v1629 = vadd.f32 %v1544, %v1628
    %v1630 = vpop.f32.mrb[0].mxu0
    %v1631 = vpop.f32.mrb[0].mxu0
    %v1632 = vadd.f32 %v1544, %v1631
    %v1633 = vpop.f32.mrb[0].mxu0
    %1634 = vmatprep.mubr.bf16.mxu0 0
    %1635 = vmatmul.mubr.bf16.gmra.mrb[0].mxu0 %v1520
    %v1636 = vpop.f32.mrb[0].mxu0
    %v1637 = vadd.f32 %v1544, %v1636
    %v1638 = vpop.f32.mrb[0].mxu0
    %v1639 = vpop.f32.mrb[0].mxu0
    %v1640 = vadd.f32 %v1544, %v1639
    %v1641 = vpop.f32.mrb[0].mxu0
    %1642 = vmatprep.mubr.bf16.mxu0 0
    %1643 = vmatmul.mubr.bf16.gmra.mrb[0].mxu0 %v1521
    %v1644 = vpop.f32.mrb[0].mxu0
    %v1645 = vadd.f32 %v1544, %v1644
    %v1646 = vpop.f32.mrb[0].mxu0
    %v1647 = vpop.f32.mrb[0].mxu0
    %v1648 = vadd.f32 %v1544, %v1647
    %v1649 = vpop.f32.mrb[0].mxu0
    %1650 = vmatprep.mubr.bf16.mxu0 0
    %1651 = vmatmul.mubr.bf16.gmra.mrb[0].mxu0 %v1522
    %v1652 = vpop.f32.mrb[0].mxu0
    %v1653 = vadd.f32 %v1544, %v1652
    %v1654 = vpop.f32.mrb[0].mxu0
    %v1655 = vpop.f32.mrb[0].mxu0
    %v1656 = vadd.f32 %v1544, %v1655
    %v1657 = vpop.f32.mrb[0].mxu0
    %1658 = vdwg.mxu0
    %v1659 = vtanh.pop %v1629
    %v1660 = vtanh.pop %v1632
    %v1661 = vtanh.pop %v1637
    %v1662 = vtanh.pop %v1640
    %v1663 = vtanh.pop %v1645
    %v1664 = vtanh.pop %v1648
    %v1665 = vtanh.pop %v1653
    %v1666 = vtanh.pop %v1656
    %v1667 = vld [vmem:[%s7] sm:$0xff]
    %v1668 = vld [vmem:[%s7 + $0x8] sm:$0xff]
    %v1669 = vld [vmem:[%s7 + $0x10] sm:$0xff]
    %v1670 = vld [vmem:[%s7 + $0x18] sm:$0xff]
    %v1671 = vld [vmem:[%s7 + $0x20] sm:$0xff]
    %v1672 = vld [vmem:[%s7 + $0x28] sm:$0xff]
    %v1673 = vld [vmem:[%s7 + $0x30] sm:$0xff]
    %v1674 = vld [vmem:[%s7 + $0x38] sm:$0xff]
    %v1676 = vsel %vm190, %v1659, 0
    %v1679 = vsel %vm190, %v1660, 0
    %v1682 = vsel %vm190, %v1661, 0
    %v1685 = vsel %vm190, %v1662, 0
    %v1688 = vsel %vm190, %v1663, 0
    %v1691 = vsel %vm190, %v1664, 0
    %v1694 = vsel %vm190, %v1665, 0
    %v1697 = vsel %vm190, %v1666, 0
    %1699 = vmatprep.subr.mxu0 0.0
    %1700 = vmatpush1.msra.mxu0 %v1667
    %1701 = vmatprep.subr.mxu0 0.0
    %1702 = vmatpush1.msra.mxu0 %v1668
    %1703 = vmatprep.subr.mxu0 0.0
    %1704 = vmatpush1.msra.mxu0 %v1669
    %1705 = vmatprep.subr.mxu0 0.0
    %1706 = vmatpush1.msra.mxu0 %v1670
    %1707 = vmatprep.subr.mxu0 0.0
    %1708 = vmatpush1.msra.mxu0 %v1671
    %1709 = vmatprep.subr.mxu0 0.0
    %1710 = vmatpush1.msra.mxu0 %v1672
    %1711 = vmatprep.subr.mxu0 0.0
    %1712 = vmatpush1.msra.mxu0 %v1673
    %1713 = vmatprep.subr.mxu0 0.0
    %1714 = vmatpush1.msra.mxu0 %v1674
    %1715 = vmatprep.subr.mxu0 0.0
    %1716 = vmatpush1.msra.mxu0 0.0
    %1717 = vmatprep.subr.mxu0 0.0
    %1718 = vmatpush1.msra.mxu0 0.0
    %1719 = vmatprep.subr.mxu0 0.0
    %1720 = vmatpush1.msra.mxu0 0.0
    %1721 = vmatprep.subr.mxu0 0.0
    %1722 = vmatpush1.msra.mxu0 0.0
    %1723 = vmatprep.subr.mxu0 0.0
    %1724 = vmatpush1.msra.mxu0 0.0
    %1725 = vmatprep.subr.mxu0 0.0
    %1726 = vmatpush1.msra.mxu0 0.0
    %1727 = vmatprep.subr.mxu0 0.0
    %1728 = vmatpush1.msra.mxu0 0.0
    %1729 = vmatprep.subr.mxu0 0.0
    %1730 = vmatpush1.msra.mxu0 0.0
    %1731 = vmatprep.subr.mxu0 0.0
    %1732 = vmatpush1.msra.mxu0 0.0
    %1733 = vmatprep.subr.mxu0 0.0
    %1734 = vmatpush1.msra.mxu0 0.0
    %1735 = vmatprep.subr.mxu0 0.0
    %1736 = vmatpush1.msra.mxu0 0.0
    %1737 = vmatprep.subr.mxu0 0.0
    %1738 = vmatpush1.msra.mxu0 0.0
    %1739 = vmatprep.subr.mxu0 0.0
    %1740 = vmatpush1.msra.mxu0 0.0
    %1741 = vmatprep.subr.mxu0 0.0
    %1742 = vmatpush1.msra.mxu0 0.0
    %1743 = vmatprep.subr.mxu0 0.0
    %1744 = vmatpush1.msra.mxu0 0.0
    %1745 = vmatprep.subr.mxu0 0.0
    %1746 = vmatpush1.msra.mxu0 0.0
    %1747 = vmatprep.subr.mxu0 0.0
    %1748 = vmatpush1.msra.mxu0 0.0
    %1749 = vmatprep.subr.mxu0 0.0
    %1750 = vmatpush1.msra.mxu0 0.0
    %1751 = vmatprep.subr.mxu0 0.0
    %1752 = vmatpush1.msra.mxu0 0.0
    %1753 = vmatprep.subr.mxu0 0.0
    %1754 = vmatpush1.msra.mxu0 0.0
    %1755 = vmatprep.subr.mxu0 0.0
    %1756 = vmatpush1.msra.mxu0 0.0
    %1757 = vmatprep.subr.mxu0 0.0
    %1758 = vmatpush1.msra.mxu0 0.0
    %1759 = vmatprep.subr.mxu0 0.0
    %1760 = vmatpush1.msra.mxu0 0.0
    %1761 = vmatprep.subr.mxu0 0.0
    %1762 = vmatpush1.msra.mxu0 0.0
    %1763 = vmatprep.mubr.f32.mxu0 0.0
    %1764 = vmatmul.mubr.f32.gmra.mrb[0].mxu0 %v1676
    %v1765 = vpop.f32.mrb[0].mxu0
    %v1766 = vadd.f32 0.0, %v1765
    %v1767 = vpop.f32.mrb[0].mxu0
    %1768 = vmatprep.mubr.f32.mxu0 0.0
    %1769 = vmatmul.mubr.f32.gmra.mrb[0].mxu0 %v1679
    %v1770 = vpop.f32.mrb[0].mxu0
    %v1771 = vadd.f32 0.0, %v1770
    %v1772 = vpop.f32.mrb[0].mxu0
    %1773 = vmatprep.mubr.f32.mxu0 0.0
    %1774 = vmatmul.mubr.f32.gmra.mrb[0].mxu0 %v1682
    %v1775 = vpop.f32.mrb[0].mxu0
    %v1776 = vadd.f32 0.0, %v1775
    %v1777 = vpop.f32.mrb[0].mxu0
    %1778 = vmatprep.mubr.f32.mxu0 0.0
    %1779 = vmatmul.mubr.f32.gmra.mrb[0].mxu0 %v1685
    %v1780 = vpop.f32.mrb[0].mxu0
    %v1781 = vadd.f32 0.0, %v1780
    %v1782 = vpop.f32.mrb[0].mxu0
    %1783 = vmatprep.mubr.f32.mxu0 0.0
    %1784 = vmatmul.mubr.f32.gmra.mrb[0].mxu0 %v1688
    %v1785 = vpop.f32.mrb[0].mxu0
    %v1786 = vadd.f32 0.0, %v1785
    %v1787 = vpop.f32.mrb[0].mxu0
    %1788 = vmatprep.mubr.f32.mxu0 0.0
    %1789 = vmatmul.mubr.f32.gmra.mrb[0].mxu0 %v1691
    %v1790 = vpop.f32.mrb[0].mxu0
    %v1791 = vadd.f32 0.0, %v1790
    %v1792 = vpop.f32.mrb[0].mxu0
    %1793 = vmatprep.mubr.f32.mxu0 0.0
    %1794 = vmatmul.mubr.f32.gmra.mrb[0].mxu0 %v1694
    %v1795 = vpop.f32.mrb[0].mxu0
    %v1796 = vadd.f32 0.0, %v1795
    %v1797 = vpop.f32.mrb[0].mxu0
    %1798 = vmatprep.mubr.f32.mxu0 0.0
    %1799 = vmatmul.mubr.f32.gmra.mrb[0].mxu0 %v1697
    %v1800 = vpop.f32.mrb[0].mxu0
    %v1801 = vadd.f32 0.0, %v1800
    %v1802 = vpop.f32.mrb[0].mxu0
    %1803 = vdwg.mxu0
    %v1804 = vmax.f32 %v1766, %v1771
    %v1805 = vmax.f32 %v1804, %v1776
    %v1806 = vmax.f32 %v1805, %v1781
    %v1807 = vmax.f32 %v1806, %v1786
    %v1808 = vmax.f32 %v1807, %v1791
    %v1809 = vmax.f32 %v1808, %v1796
    %v1810 = vmax.f32 %v1809, %v1801
    %v1811 = vsub.f32 %v1766, %v1810
    %v1812 = vmul.f32 %v1811, 1.442695
    %v1813 = vpow.pop %v1812
    %v1814 = vadd.f32 %v1813, 0.0
    %v1815 = vmul.f32 %v1813, %v1505
    %v1816 = vadd.f32 %v1815, 0.0
    %v1817 = vsub.f32 %v1771, %v1810
    %v1818 = vmul.f32 %v1817, 1.442695
    %v1819 = vpow.pop %v1818
    %v1820 = vadd.f32 %v1814, %v1819
    %v1821 = vmul.f32 %v1819, %v1508
    %v1822 = vadd.f32 %v1816, %v1821
    %v1823 = vsub.f32 %v1776, %v1810
    %v1824 = vmul.f32 %v1823, 1.442695
    %v1825 = vpow.pop %v1824
    %v1826 = vadd.f32 %v1820, %v1825
    %v1827 = vmul.f32 %v1825, %v1511
    %v1828 = vadd.f32 %v1822, %v1827
    %v1829 = vsub.f32 %v1781, %v1810
    %v1830 = vmul.f32 %v1829, 1.442695
    %v1831 = vpow.pop %v1830
    %v1832 = vadd.f32 %v1826, %v1831
    %v1833 = vmul.f32 %v1831, %v1514
    %v1834 = vadd.f32 %v1828, %v1833
    %v1835 = vsub.f32 %v1786, %v1810
    %v1836 = vmul.f32 %v1835, 1.442695
    %v1837 = vpow.pop %v1836
    %v1838 = vadd.f32 %v1832, %v1837
    %v1839 = vmul.f32 %v1837, %v1515
    %v1840 = vadd.f32 %v1834, %v1839
    %v1841 = vsub.f32 %v1791, %v1810
    %v1842 = vmul.f32 %v1841, 1.442695
    %v1843 = vpow.pop %v1842
    %v1844 = vadd.f32 %v1838, %v1843
    %v1845 = vmul.f32 %v1843, %v1516
    %v1846 = vadd.f32 %v1840, %v1845
    %v1847 = vsub.f32 %v1796, %v1810
    %v1848 = vmul.f32 %v1847, 1.442695
    %v1849 = vpow.pop %v1848
    %v1850 = vadd.f32 %v1844, %v1849
    %v1851 = vmul.f32 %v1849, %v1517
    %v1852 = vadd.f32 %v1846, %v1851
    %v1853 = vsub.f32 %v1801, %v1810
    %v1854 = vmul.f32 %v1853, 1.442695
    %v1855 = vpow.pop %v1854
    %v1856 = vadd.f32 %v1850, %v1855
    %v1857 = vmul.f32 %v1855, %v1518
    %v1858 = vadd.f32 %v1852, %v1857
    %v1859 = vrcp.pop %v1856
    %v1860 = vmul.f32 %v1858, %v1859
    %s1861 = sld [smem:[#allocation4]]
    %v1862 = vstv %s1861
    %vm1863 = vcmp.eq.s32.totalorder %v1501, %v1862
    %v1864 = vsel %vm1863, 1, 0
    %v1865 = vcvt.s32.f32 %v1864
    %s1866 = sld [smem:[#allocation4 + $0x1]]
    %v1867 = vstv %s1866
    %vm1868 = vcmp.eq.s32.totalorder %v1501, %v1867
    %v1869 = vsel %vm1868, 1, 0
    %v1870 = vcvt.s32.f32 %v1869
    %s1871 = sld [smem:[#allocation4 + $0x2]]
    %v1872 = vstv %s1871
    %vm1873 = vcmp.eq.s32.totalorder %v1501, %v1872
    %v1874 = vsel %vm1873, 1, 0
    %v1875 = vcvt.s32.f32 %v1874
    %s1876 = sld [smem:[#allocation4 + $0x3]]
    %v1877 = vstv %s1876
    %vm1878 = vcmp.eq.s32.totalorder %v1501, %v1877
    %v1879 = vsel %vm1878, 1, 0
    %v1880 = vcvt.s32.f32 %v1879
    %vm1881 = vcmask 1040384
    %v1882 = vsel %vm1881, %v1865, %v1870
    %vm1883 = vcmask 1041408
    %v1884 = vsel %vm1883, %v1882, %v1875
    %vm1885 = vcmask 1042432
    %v1886 = vsel %vm1885, %v1884, %v1880
    %vm1887 = vcmask 64512
    %v1889 = vsel %vm1887, %v1886, 0
    %1891 = vmatprep.subr.mxu0 0.0
    %1892 = vmatpush1.msra.mxu0 %v1860
    %1893 = vmatprep.subr.mxu0 0.0
    %1894 = vmatpush1.msra.mxu0 0.0
    %1895 = vmatprep.subr.mxu0 0.0
    %1896 = vmatpush1.msra.mxu0 0.0
    %1897 = vmatprep.subr.mxu0 0.0
    %1898 = vmatpush1.msra.mxu0 0.0
    %1899 = vmatprep.subr.mxu0 0.0
    %1900 = vmatpush1.msra.mxu0 0.0
    %1901 = vmatprep.subr.mxu0 0.0
    %1902 = vmatpush1.msra.mxu0 0.0
    %1903 = vmatprep.subr.mxu0 0.0
    %1904 = vmatpush1.msra.mxu0 0.0
    %1905 = vmatprep.subr.mxu0 0.0
    %1906 = vmatpush1.msra.mxu0 0.0
    %1907 = vmatprep.subr.mxu0 0.0
    %1908 = vmatpush1.msra.mxu0 0.0
    %1909 = vmatprep.subr.mxu0 0.0
    %1910 = vmatpush1.msra.mxu0 0.0
    %1911 = vmatprep.subr.mxu0 0.0
    %1912 = vmatpush1.msra.mxu0 0.0
    %1913 = vmatprep.subr.mxu0 0.0
    %1914 = vmatpush1.msra.mxu0 0.0
    %1915 = vmatprep.subr.mxu0 0.0
    %1916 = vmatpush1.msra.mxu0 0.0
    %1917 = vmatprep.subr.mxu0 0.0
    %1918 = vmatpush1.msra.mxu0 0.0
    %1919 = vmatprep.subr.mxu0 0.0
    %1920 = vmatpush1.msra.mxu0 0.0
    %1921 = vmatprep.subr.mxu0 0.0
    %1922 = vmatpush1.msra.mxu0 0.0
    %1923 = vmatprep.subr.mxu0 0.0
    %1924 = vmatpush1.msra.mxu0 0.0
    %1925 = vmatprep.subr.mxu0 0.0
    %1926 = vmatpush1.msra.mxu0 0.0
    %1927 = vmatprep.subr.mxu0 0.0
    %1928 = vmatpush1.msra.mxu0 0.0
    %1929 = vmatprep.subr.mxu0 0.0
    %1930 = vmatpush1.msra.mxu0 0.0
    %1931 = vmatprep.subr.mxu0 0.0
    %1932 = vmatpush1.msra.mxu0 0.0
    %1933 = vmatprep.subr.mxu0 0.0
    %1934 = vmatpush1.msra.mxu0 0.0
    %1935 = vmatprep.subr.mxu0 0.0
    %1936 = vmatpush1.msra.mxu0 0.0
    %1937 = vmatprep.subr.mxu0 0.0
    %1938 = vmatpush1.msra.mxu0 0.0
    %1939 = vmatprep.subr.mxu0 0.0
    %1940 = vmatpush1.msra.mxu0 0.0
    %1941 = vmatprep.subr.mxu0 0.0
    %1942 = vmatpush1.msra.mxu0 0.0
    %1943 = vmatprep.subr.mxu0 0.0
    %1944 = vmatpush1.msra.mxu0 0.0
    %1945 = vmatprep.subr.mxu0 0.0
    %1946 = vmatpush1.msra.mxu0 0.0
    %1947 = vmatprep.subr.mxu0 0.0
    %1948 = vmatpush1.msra.mxu0 0.0
    %1949 = vmatprep.subr.mxu0 0.0
    %1950 = vmatpush1.msra.mxu0 0.0
    %1951 = vmatprep.subr.mxu0 0.0
    %1952 = vmatpush1.msra.mxu0 0.0
    %1953 = vmatprep.subr.mxu0 0.0
    %1954 = vmatpush1.msra.mxu0 0.0
    %1955 = vmatprep.mubr.f32.mxu0 0.0
    %1956 = vmatmul.mubr.f32.gmra.mrb[0].mxu0 %v1889
    %v1957 = vpop.f32.mrb[0].mxu0
    %v1958 = vadd.f32 0.0, %v1957
    %v1959 = vpop.f32.mrb[0].mxu0
    %1960 = vdwg.mxu0
    %1961 = vst [vmem:[#allocation7] sm:$0xf] %v1958
    // Predicated region
    $region38: #{desc_encoder_forward.1} parent=1 // pred_check
      _
    $region39: #{desc_encoder_forward.1} parent=1 // pred_check_branch
      %1963 = sbr.rel (0) target = $region41
    $region40: #{desc_encoder_forward.1} parent=1 // pred_region
      %s1965 = ssub.s32 64, 64
      %1966 = vsyncadd [#allocation5], %s1965
      %s1968 = sshll.u32 [#allocation7], 4
      %s1969 = int_to_ptr.vmem [resolvable:$true] %s1968
      %1971 = dma.vmem_to_hbm [thread:$0]  %s1969, 64, %s8, [#allocation5]
    $region41: #{desc_encoder_forward.1} parent=1 // pred_fallthru
      _
    // Predicated region
    $region42: #{desc_encoder_forward.1} parent=1 // pred_check
      _
    $region43: #{desc_encoder_forward.1} parent=1 // pred_check_branch
      %1973 = sbr.rel (0) target = $region45
    $region44: #{desc_encoder_forward.1} parent=1 // pred_region
      %1974 = dma.done [#allocation5], 64
    $region45: #{desc_encoder_forward.1} parent=1 // pred_fallthru
      _
    %1975 = vsyncpa [#allocation5], 1
    %1976 = vsyncpa [#allocation6], 1

</llo_original>
